<compile_context>
chip_gen: v5e
topology: v5e:2x2
jax: 0.10.0
libtpu: 0.0.40
codegen_flags: <defaults>
</compile_context>

<pallas_src>
import functools
import math

import jax
import jax.numpy as jnp
from jax import lax
from jax.experimental import pallas as pl
from jax.experimental.pallas import tpu as pltpu


def _round_up(n: int, m: int) -> int:
    return ((n + m - 1) // m) * m


def _vmem_budget_bytes() -> int:
    """Per-TensorCore VMEM we allow ourselves (physical minus headroom)."""
    try:
        cap = int(pltpu.get_tpu_info().vmem_capacity_bytes)
    except Exception:
        cap = 0
    if cap <= 0:
        cap = 64 * 1024 * 1024          # conservative (v7x-sized) default
    return max(16 * 1024 * 1024, min(cap, 128 * 1024 * 1024) - 8 * 1024 * 1024)


def _num_tensorcores() -> int:
    """2 for chips whose Pallas 'parallel' grid axes span 2 TensorCores."""
    try:
        kind = jax.devices()[0].device_kind.lower()
    except Exception:
        return 1
    if "v7" in kind:
        return 2
    if "v4" in kind:
        return 2
    if "v5" in kind and "lite" not in kind and "5e" not in kind:
        return 2                        # v5p megacore
    return 1


def attn_pooling_kernel(x_ref, m_ref, w1_ref, b1_ref, w2c_ref, w2r_ref, b2_ref,
                        o_ref, scores_ref, *, chunk_b, n_chunks, flat_scores,
                        out_2d):
    # x_ref:   (BB, T, H) f32/bf16      m_ref:   (BB, 1, T) f32 (0/1 mask)
    # w1_ref:  (H, D) f32/bf16          b1_ref:  (1, D) f32
    # w2c_ref: (D, 1) f32               w2r_ref: (1, D) f32
    # b2_ref:  (1, 1) f32 in SMEM       o_ref:   (BB, H) or (BB, 1, H) f32
    # scores_ref: (BB, 1, T) f32 VMEM scratch
    bb, tt, hh = x_ref.shape
    dd = w1_ref.shape[1]

    w1 = w1_ref[...]                     # resident (constant index_map)
    b1 = b1_ref[...]                     # (1, D) f32

    def score_chunk(c, carry):
        r0 = c * chunk_b
        # intermediate projector: one flat (CB*T, H) @ (H, D) MXU matmul.
        xf = x_ref[pl.ds(r0, chunk_b), :, :].reshape(chunk_b * tt, hh)
        hid = jnp.dot(xf, w1, preferred_element_type=jnp.float32)
        hid = jnp.maximum(hid + b1, 0.0)                   # (CB*T, D) f32
        # NOTE: PyTorch multiplies hid by the mask here; masked positions are
        # forced to -1e30 AND e is re-multiplied by the mask in the softmax
        # below, so the pooled output is unchanged and the multiply is skipped.
        if flat_scores:
            # projector: flat lane-contracted MXU matmul; relayout only the
            # tiny (CB*T, 1) score column to lane-major (CB, 1, T).
            sc = jnp.dot(hid, w2c_ref[...],
                         preferred_element_type=jnp.float32)
            sc = sc.reshape(chunk_b, 1, tt)
        else:
            hid3 = hid.reshape(chunk_b, tt, dd)
            w2b = jnp.broadcast_to(w2r_ref[...].reshape(1, 1, dd),
                                   (chunk_b, 1, dd))
            sc = jnp.einsum("bod,btd->bot", w2b, hid3,
                            preferred_element_type=jnp.float32)
        scores_ref[pl.ds(r0, chunk_b), :, :] = sc
        return carry

    if n_chunks == 1:
        score_chunk(0, 0)
    else:
        if n_chunks <= 8:
            unroll = True
        else:
            unroll = max(d for d in (8, 4, 2, 1) if n_chunks % d == 0)
        lax.fori_loop(0, n_chunks, score_chunk, 0, unroll=unroll)

    # masked softmax along T (the 128-lane axis); exact reciprocal.
    m = m_ref[...]                                         # (BB, 1, T)
    s = scores_ref[...] + b2_ref[0, 0]
    s = jnp.where(m > 0.0, s, jnp.float32(-1e30))
    s_max = jnp.max(s, axis=-1, keepdims=True)
    e = jnp.exp(s - s_max) * m
    denom = jnp.sum(e, axis=-1, keepdims=True) + jnp.float32(1e-13)
    attn = e * (1.0 / denom)                               # (BB, 1, T) f32

    # pooled = attn @ xinit on the MXU; x streamed straight from its ref.
    pooled = jnp.einsum("bot,bth->boh",
                        attn.astype(x_ref.dtype), x_ref[...],
                        preferred_element_type=jnp.float32)  # (BB, 1, H) f32
    if out_2d:
        o_ref[...] = pooled.reshape(bb, hh).astype(o_ref.dtype)
    else:
        o_ref[...] = pooled.astype(o_ref.dtype)


def attn_pooling(xinit, xmask, w1, b1, w2, b2, *, block_b=None,
                 use_bf16_matmul=True):
    """xinit: (B, T, H), xmask: (B, T) int/float -> (B, H) f32."""
    B, T, H = xinit.shape
    D = w1.shape[1]

    f32 = jnp.float32
    xdt = jnp.bfloat16 if use_bf16_matmul else f32
    xbytes = 2 if use_bf16_matmul else 4

    # TPU-friendly padding: T -> multiple of 16 (covers bf16 sublane packing),
    # H/D -> multiples of 128 (lanes).
    Tp = _round_up(T, 16)
    Hp = _round_up(H, 128)
    Dp = _round_up(D, 128)

    ntc = _num_tensorcores()
    budget = _vmem_budget_bytes()

    # ---- block sizing --------------------------------------------------
    CB = max(1, min(512 // Tp, B))                 # batch rows per compute chunk
    x_row = Tp * Hp * xbytes
    if block_b is not None:
        BB = _round_up(max(1, int(block_b)), CB)
    else:
        target_x = 8 * 1024 * 1024                 # ~8 MiB x block per grid step
        BB = max(CB, (target_x // max(x_row, 1)) // CB * CB)
    BB = min(BB, _round_up(B, CB))
    if ntc >= 2 and B > CB:                        # keep >=2 steps for 2 TCs
        n_chunks_total = -(-B // CB)
        BB = min(BB, CB * (-(-n_chunks_total // 2)))

    def _vmem_est(bb):
        return (2 * bb * Tp * Hp * xbytes          # x block (double buffered)
                + 2 * bb * 8 * Tp * 4              # mask block
                + 2 * bb * Hp * 4                  # output block
                + 2 * Hp * Dp * xbytes             # W1 (worst case 2 buffers)
                + 2 * (Dp * 128 + 16 * Dp) * 4     # w2 col/row + b1 padding
                + bb * 8 * Tp * 4                  # scores scratch
                + 4 * CB * Tp * Dp * 4             # hid chunk + temporaries
                + (4 << 20))                       # slack
    while BB > CB and _vmem_est(BB) > budget:
        BB -= CB

    if BB >= B:
        BB = _round_up(B, CB)                      # single grid step
    else:
        L = CB * 8 // math.gcd(CB, 8)              # 2-D out block needs BB % 8 == 0
        BB = max(L, (BB // L) * L)
        if BB >= B:
            BB = _round_up(B, CB)
    Bp = _round_up(B, BB)
    n_chunks = BB // CB
    grid = Bp // BB
    vmem_limit = int(min(budget, 128 * 1024 * 1024))

    # ---- pad / cast operands in the wrapper (no in-kernel casts) --------
    x = xinit.astype(xdt)
    mask = xmask.astype(f32)
    if Tp != T or Hp != H:
        x = jnp.pad(x, ((0, 0), (0, Tp - T), (0, Hp - H)))
    if Tp != T:
        mask = jnp.pad(mask, ((0, 0), (0, Tp - T)))
    if Bp != B:
        # padded batch rows are fully masked -> attn == 0 -> pooled == 0
        x = jnp.pad(x, ((0, Bp - B), (0, 0), (0, 0)))
        mask = jnp.pad(mask, ((0, Bp - B), (0, 0)))
    mask3 = mask.reshape(Bp, 1, Tp)                # lane-major mask stream

    w1p = w1.astype(xdt)
    if Hp != H or Dp != D:
        w1p = jnp.pad(w1p, ((0, Hp - H), (0, Dp - D)))
    b1p = b1.astype(f32).reshape(1, D)
    w2row = w2.astype(f32).reshape(1, D)
    w2col = w2.astype(f32).reshape(D, 1)
    if Dp != D:
        b1p = jnp.pad(b1p, ((0, 0), (0, Dp - D)))
        w2row = jnp.pad(w2row, ((0, 0), (0, Dp - D)))
        w2col = jnp.pad(w2col, ((0, Dp - D), (0, 0)))
    b2s = b2.astype(f32).reshape(1, 1)

    # ---- build + run (with lowering fallbacks) --------------------------
    def _build(flat_scores, out_2d, buffered_weights):
        wkw = dict(pipeline_mode=pl.Buffered(1)) if buffered_weights else {}

        def wspec(shape):
            return pl.BlockSpec(shape, lambda b: (0,) * len(shape), **wkw)

        in_specs = [
            pl.BlockSpec((BB, Tp, Hp), lambda b: (b, 0, 0)),      # xinit
            pl.BlockSpec((BB, 1, Tp), lambda b: (b, 0, 0)),       # mask
            wspec((Hp, Dp)),                                      # W1
            wspec((1, Dp)),                                       # b1
            wspec((Dp, 1)),                                       # W2 column
            wspec((1, Dp)),                                       # W2 row
            pl.BlockSpec(memory_space=pltpu.MemorySpace.SMEM),    # b2 scalar
        ]
        if out_2d:
            out_shape = jax.ShapeDtypeStruct((Bp, Hp), f32)
            out_spec = pl.BlockSpec((BB, Hp), lambda b: (b, 0))
        else:
            out_shape = jax.ShapeDtypeStruct((Bp, 1, Hp), f32)
            out_spec = pl.BlockSpec((BB, 1, Hp), lambda b: (b, 0, 0))

        kernel = functools.partial(
            attn_pooling_kernel, chunk_b=CB, n_chunks=n_chunks,
            flat_scores=flat_scores, out_2d=out_2d)

        return pl.pallas_call(
            kernel,
            out_shape=out_shape,
            grid_spec=pltpu.PrefetchScalarGridSpec(
                num_scalar_prefetch=0,
                grid=(grid,),
                in_specs=in_specs,
                out_specs=out_spec,
                scratch_shapes=[pltpu.VMEM((BB, 1, Tp), f32)]),
            compiler_params=pltpu.CompilerParams(
                dimension_semantics=("parallel",),
                vmem_limit_bytes=vmem_limit),
        )

    attempts = (
        (True, True, True),     # flat MXU scores + 2-D out + Buffered(1) weights
        (True, True, False),    # same, without Buffered(1)
        (False, False, False),  # proven einsum score path + 3-D out
    )
    out = None
    last_err = None
    for cfg in attempts:
        try:
            out = _build(*cfg)(x, mask3, w1p, b1p, w2col, w2row, b2s)
            out = jax.block_until_ready(out)
            break
        except Exception as err:    # lowering/compile fallback
            last_err = err
            out = None
    if out is None:
        raise last_err

    # (Bp, Hp) (or (Bp, 1, Hp)) -> (B, H): slice off padding.
    return out.reshape(Bp, Hp)[:B, :H]


def attn_pooling_ref(xinit, xmask, w1, b1, w2, b2):
    """Pure-JAX reference mirroring the PyTorch forward (incl. the h*mask mul)."""
    m = xmask.astype(jnp.float32)                                     # (B, T)
    h = jnp.maximum(jnp.einsum("bth,hd->btd", xinit, w1) + b1, 0.0)
    h = h * m[..., None]
    scores = (jnp.einsum("btd,do->bto", h, w2) + b2)[..., 0]          # (B, T)
    scores = jnp.where(m > 0, scores, -1e30)
    scores = scores - jnp.max(scores, axis=-1, keepdims=True)
    e = jnp.exp(scores) * m
    attn = e / (jnp.sum(e, axis=-1, keepdims=True) + 1e-13)
    return jnp.einsum("bt,bth->bh", attn, xinit)


if __name__ == "__main__":
    def _run_case(B, T, H, D, seed, use_bf16, atol, rtol):
        key = jax.random.PRNGKey(seed)
        k_x, k_m, k_w1, k_b1, k_w2, k_b2 = jax.random.split(key, 6)
        xinit = jax.random.normal(k_x, (B, T, H), dtype=jnp.float32)
        xmask = (jax.random.uniform(k_m, (B, T)) > 0.25).astype(jnp.int32)
        xmask = xmask.at[:, 0].set(1)          # >= 1 valid token per row
        w1 = jax.random.normal(k_w1, (H, D), dtype=jnp.float32) * 0.1
        b1 = jax.random.normal(k_b1, (D,), dtype=jnp.float32) * 0.1
        w2 = jax.random.normal(k_w2, (D, 1), dtype=jnp.float32) * 0.1
        b2 = jax.random.normal(k_b2, (1,), dtype=jnp.float32) * 0.1

        out = attn_pooling(xinit, xmask, w1, b1, w2, b2,
                           use_bf16_matmul=use_bf16)
        out = jax.block_until_ready(out)
        ref = attn_pooling_ref(xinit, xmask, w1, b1, w2, b2)
        assert out.shape == (B, H)
        assert jnp.allclose(out, ref, atol=atol, rtol=rtol), (out, ref)

    # unaligned small shapes: T/H/D padding + padded (fully masked) rows, f32 path
    _run_case(B=3, T=10, H=48, D=40, seed=0, use_bf16=False, atol=5e-3, rtol=5e-3)
    # aligned shapes: no-padding path, f32
    _run_case(B=4, T=16, H=128, D=128, seed=1, use_bf16=False, atol=5e-3, rtol=5e-3)
    # bf16-shipped x / W1 (default, HBM-bound win on v6e/v7x): looser tolerance
    _run_case(B=5, T=24, H=64, D=96, seed=2, use_bf16=True, atol=3e-2, rtol=3e-2)
    print("KERNEL_OK")
</pallas_src>

<mosaic_0001>
module attributes {stable_mosaic.version = 11 : i64} {
  func.func @attn_pooling_kernel(%arg0: i32, %arg1: memref<3x16x128xf32, #tpu.memory_space<vmem>>, %arg2: memref<3x1x16xf32, #tpu.memory_space<vmem>>, %arg3: memref<128x128xf32, #tpu.memory_space<vmem>>, %arg4: memref<1x128xf32, #tpu.memory_space<vmem>>, %arg5: memref<128x1xf32, #tpu.memory_space<vmem>>, %arg6: memref<1x128xf32, #tpu.memory_space<vmem>>, %arg7: memref<1x1xf32, #tpu.memory_space<smem>>, %arg8: memref<3x128xf32, #tpu.memory_space<vmem>>, %arg9: memref<3x1x16xf32, #tpu.memory_space<vmem>>) attributes {dimension_semantics = [#tpu.dimension_semantics<parallel>], iteration_bounds = array<i64: 1>, scalar_prefetch = 0 : i64, scratch_operands = 1 : i64, tpu.core_type = #tpu.core_type<tc>, window_params = [{transform_indices = @transform_0, window_bounds = array<i64: 3, 16, 128>}, {transform_indices = @transform_1, window_bounds = array<i64: 3, 1, 16>}, {pipeline_mode = #tpu.pipeline_mode<synchronous>, transform_indices = @transform_2, window_bounds = array<i64: 128, 128>}, {pipeline_mode = #tpu.pipeline_mode<synchronous>, transform_indices = @transform_3, window_bounds = array<i64: 1, 128>}, {pipeline_mode = #tpu.pipeline_mode<synchronous>, transform_indices = @transform_4, window_bounds = array<i64: 128, 1>}, {pipeline_mode = #tpu.pipeline_mode<synchronous>, transform_indices = @transform_5, window_bounds = array<i64: 1, 128>}, {transform_indices = @transform_6, window_bounds = array<i64: 1, 1>}, {transform_indices = @transform_7, window_bounds = array<i64: 3, 128>}]} {
    %c0 = arith.constant 0 : index
    %c0_0 = arith.constant 0 : index
    %0 = vector.load %arg3[%c0, %c0_0] : memref<128x128xf32, #tpu.memory_space<vmem>>, vector<128x128xf32>
    %c0_1 = arith.constant 0 : index
    %c0_2 = arith.constant 0 : index
    %1 = vector.load %arg4[%c0_1, %c0_2] : memref<1x128xf32, #tpu.memory_space<vmem>>, vector<1x128xf32>
    %c0_3 = arith.constant 0 : index
    %c0_4 = arith.constant 0 : index
    %c0_5 = arith.constant 0 : index
    %2 = vector.load %arg1[%c0_3, %c0_4, %c0_5] : memref<3x16x128xf32, #tpu.memory_space<vmem>>, vector<3x16x128xf32>
    %3 = vector.shape_cast %2 : vector<3x16x128xf32> to vector<48x128xf32>
    %cst = arith.constant dense<0.000000e+00> : vector<48x128xf32>
    %4 = tpu.matmul %3, %0, %cst {dimension_numbers = #tpu.dot_dimension_numbers<[1], [0], [0], [1], [0, 0, 1, 1], [], []>} : vector<48x128xf32>, vector<128x128xf32>, vector<48x128xf32> -> vector<48x128xf32>
    %5 = vector.broadcast %1 : vector<1x128xf32> to vector<48x128xf32>
    %6 = arith.addf %4, %5 : vector<48x128xf32>
    %cst_6 = arith.constant 0.000000e+00 : f32
    %7 = vector.broadcast %cst_6 : f32 to vector<48x128xf32>
    %8 = arith.maximumf %6, %7 : vector<48x128xf32>
    %c0_7 = arith.constant 0 : index
    %c0_8 = arith.constant 0 : index
    %9 = vector.load %arg5[%c0_7, %c0_8] : memref<128x1xf32, #tpu.memory_space<vmem>>, vector<128x1xf32>
    %cst_9 = arith.constant dense<0.000000e+00> : vector<48x1xf32>
    %10 = tpu.matmul %8, %9, %cst_9 {dimension_numbers = #tpu.dot_dimension_numbers<[1], [0], [0], [1], [0, 0, 1, 1], [], []>} : vector<48x128xf32>, vector<128x1xf32>, vector<48x1xf32> -> vector<48x1xf32>
    %11 = vector.shape_cast %10 : vector<48x1xf32> to vector<3x1x16xf32>
    %c0_10 = arith.constant 0 : index
    %c0_11 = arith.constant 0 : index
    %c0_12 = arith.constant 0 : index
    %12 = vector.load %arg9[%c0_10, %c0_11, %c0_12] : memref<3x1x16xf32, #tpu.memory_space<vmem>>, vector<3x1x16xf32>
    tpu.vector_store %arg9[%c0_10, %c0_11, %c0_12], %11 {strides = array<i32>} : memref<3x1x16xf32, #tpu.memory_space<vmem>>, vector<3x1x16xf32>,
    %c0_13 = arith.constant 0 : index
    %c0_14 = arith.constant 0 : index
    %c0_15 = arith.constant 0 : index
    %13 = vector.load %arg2[%c0_13, %c0_14, %c0_15] : memref<3x1x16xf32, #tpu.memory_space<vmem>>, vector<3x1x16xf32>
    %c0_16 = arith.constant 0 : index
    %c0_17 = arith.constant 0 : index
    %c0_18 = arith.constant 0 : index
    %14 = vector.load %arg9[%c0_16, %c0_17, %c0_18] : memref<3x1x16xf32, #tpu.memory_space<vmem>>, vector<3x1x16xf32>
    %c0_19 = arith.constant 0 : index
    %c0_20 = arith.constant 0 : index
    %15 = memref.load %arg7[%c0_19, %c0_20] : memref<1x1xf32, #tpu.memory_space<smem>>
    %16 = vector.broadcast %15 : f32 to vector<3x1x16xf32>
    %17 = arith.addf %14, %16 : vector<3x1x16xf32>
    %cst_21 = arith.constant 0.000000e+00 : f32
    %18 = vector.broadcast %cst_21 : f32 to vector<3x1x16xf32>
    %19 = arith.cmpf ogt, %13, %18 : vector<3x1x16xf32>
    %cst_22 = arith.constant -1.000000e+30 : f32
    %20 = vector.broadcast %cst_22 : f32 to vector<3x1x16xf32>
    %21 = arith.select %19, %17, %20 : vector<3x1x16xi1>, vector<3x1x16xf32>
    %cst_23 = arith.constant dense<0xFF800000> : vector<3x1xf32>
    %22 = vector.multi_reduction <maximumf>, %21, %cst_23 [2] : vector<3x1x16xf32> to vector<3x1xf32>
    %23 = vector.shape_cast %22 : vector<3x1xf32> to vector<3x1x1xf32>
    %24 = vector.broadcast %23 : vector<3x1x1xf32> to vector<3x1x16xf32>
    %25 = arith.subf %21, %24 : vector<3x1x16xf32>
    %26 = math.exp %25 : vector<3x1x16xf32>
    %27 = arith.mulf %26, %13 : vector<3x1x16xf32>
    %cst_24 = arith.constant dense<0.000000e+00> : vector<3x1xf32>
    %28 = vector.multi_reduction <add>, %27, %cst_24 [2] : vector<3x1x16xf32> to vector<3x1xf32>
    %29 = vector.shape_cast %28 : vector<3x1xf32> to vector<3x1x1xf32>
    %cst_25 = arith.constant 9.99999982E-14 : f32
    %30 = vector.broadcast %cst_25 : f32 to vector<3x1x1xf32>
    %31 = arith.addf %29, %30 : vector<3x1x1xf32>
    %cst_26 = arith.constant 1.000000e+00 : f32
    %32 = vector.broadcast %cst_26 : f32 to vector<3x1x1xf32>
    %33 = arith.divf %32, %31 : vector<3x1x1xf32>
    %34 = vector.broadcast %33 : vector<3x1x1xf32> to vector<3x1x16xf32>
    %35 = arith.mulf %27, %34 : vector<3x1x16xf32>
    %c0_27 = arith.constant 0 : index
    %c0_28 = arith.constant 0 : index
    %c0_29 = arith.constant 0 : index
    %36 = vector.load %arg1[%c0_27, %c0_28, %c0_29] : memref<3x16x128xf32, #tpu.memory_space<vmem>>, vector<3x16x128xf32>
    "tpu.trace_start"() <{level = 10 : i32, message = "bot,bth->boh"}> : () -> ()
    %cst_30 = arith.constant dense<0.000000e+00> : vector<3x1x128xf32>
    %37 = tpu.matmul %35, %36, %cst_30 {dimension_numbers = #tpu.dot_dimension_numbers<[2], [1], [1], [2], [0, 0, 0, 1, 1, 2], [0], [0]>} : vector<3x1x16xf32>, vector<3x16x128xf32>, vector<3x1x128xf32> -> vector<3x1x128xf32>
    "tpu.trace_stop"() : () -> ()
    %38 = vector.shape_cast %37 : vector<3x1x128xf32> to vector<3x128xf32>
    %c0_31 = arith.constant 0 : index
    %c0_32 = arith.constant 0 : index
    %39 = vector.load %arg8[%c0_31, %c0_32] : memref<3x128xf32, #tpu.memory_space<vmem>>, vector<3x128xf32>
    tpu.vector_store %arg8[%c0_31, %c0_32], %38 {strides = array<i32>} : memref<3x128xf32, #tpu.memory_space<vmem>>, vector<3x128xf32>,
    return
  }
  func.func @transform_0(%arg0: i32) -> (i32, i32, i32) {
    %c0_i32 = arith.constant 0 : i32
    %c0_i32_0 = arith.constant 0 : i32
    %c0_i32_1 = arith.constant 0 : i32
    return %arg0, %c0_i32, %c0_i32_0 : i32, i32, i32
  }
  func.func @transform_1(%arg0: i32) -> (i32, i32, i32) {
    %c0_i32 = arith.constant 0 : i32
    %c0_i32_0 = arith.constant 0 : i32
    %c0_i32_1 = arith.constant 0 : i32
    return %arg0, %c0_i32, %c0_i32_0 : i32, i32, i32
  }
  func.func @transform_2(%arg0: i32) -> (i32, i32) {
    %c0_i32 = arith.constant 0 : i32
    %c0_i32_0 = arith.constant 0 : i32
    %c0_i32_1 = arith.constant 0 : i32
    return %c0_i32, %c0_i32_0 : i32, i32
  }
  func.func @transform_3(%arg0: i32) -> (i32, i32) {
    %c0_i32 = arith.constant 0 : i32
    %c0_i32_0 = arith.constant 0 : i32
    %c0_i32_1 = arith.constant 0 : i32
    return %c0_i32, %c0_i32_0 : i32, i32
  }
  func.func @transform_4(%arg0: i32) -> (i32, i32) {
    %c0_i32 = arith.constant 0 : i32
    %c0_i32_0 = arith.constant 0 : i32
    %c0_i32_1 = arith.constant 0 : i32
    return %c0_i32, %c0_i32_0 : i32, i32
  }
  func.func @transform_5(%arg0: i32) -> (i32, i32) {
    %c0_i32 = arith.constant 0 : i32
    %c0_i32_0 = arith.constant 0 : i32
    %c0_i32_1 = arith.constant 0 : i32
    return %c0_i32, %c0_i32_0 : i32, i32
  }
  func.func @transform_6(%arg0: i32) -> (i32, i32) {
    %c0_i32 = arith.constant 0 : i32
    %c0_i32_0 = arith.constant 0 : i32
    %c0_i32_1 = arith.constant 0 : i32
    return %c0_i32, %c0_i32_0 : i32, i32
  }
  func.func @transform_7(%arg0: i32) -> (i32, i32) {
    %c0_i32 = arith.constant 0 : i32
    %c0_i32_0 = arith.constant 0 : i32
    return %arg0, %c0_i32 : i32, i32
  }
}

module attributes {stable_mosaic.version = 11 : i64} {
  func.func @attn_pooling_kernel(%arg0: i32, %arg1: memref<3x16x128xf32, #tpu.memory_space<vmem>>, %arg2: memref<3x1x16xf32, #tpu.memory_space<vmem>>, %arg3: memref<128x128xf32, #tpu.memory_space<vmem>>, %arg4: memref<1x128xf32, #tpu.memory_space<vmem>>, %arg5: memref<128x1xf32, #tpu.memory_space<vmem>>, %arg6: memref<1x128xf32, #tpu.memory_space<vmem>>, %arg7: memref<1x1xf32, #tpu.memory_space<smem>>, %arg8: memref<3x128xf32, #tpu.memory_space<vmem>>, %arg9: memref<3x1x16xf32, #tpu.memory_space<vmem>>) attributes {dimension_semantics = [#tpu.dimension_semantics<parallel>], iteration_bounds = array<i64: 1>, scalar_prefetch = 0 : i64, scratch_operands = 1 : i64, tpu.core_type = #tpu.core_type<tc>, window_params = [{transform_indices = @transform_0, window_bounds = array<i64: 3, 16, 128>}, {transform_indices = @transform_1, window_bounds = array<i64: 3, 1, 16>}, {pipeline_mode = #tpu.pipeline_mode<synchronous>, transform_indices = @transform_2, window_bounds = array<i64: 128, 128>}, {pipeline_mode = #tpu.pipeline_mode<synchronous>, transform_indices = @transform_3, window_bounds = array<i64: 1, 128>}, {pipeline_mode = #tpu.pipeline_mode<synchronous>, transform_indices = @transform_4, window_bounds = array<i64: 128, 1>}, {pipeline_mode = #tpu.pipeline_mode<synchronous>, transform_indices = @transform_5, window_bounds = array<i64: 1, 128>}, {transform_indices = @transform_6, window_bounds = array<i64: 1, 1>}, {transform_indices = @transform_7, window_bounds = array<i64: 3, 128>}]} {
    %c0 = arith.constant 0 : index
    %c0_0 = arith.constant 0 : index
    %0 = vector.load %arg3[%c0, %c0_0] : memref<128x128xf32, #tpu.memory_space<vmem>>, vector<128x128xf32>
    %c0_1 = arith.constant 0 : index
    %c0_2 = arith.constant 0 : index
    %1 = vector.load %arg4[%c0_1, %c0_2] : memref<1x128xf32, #tpu.memory_space<vmem>>, vector<1x128xf32>
    %c0_3 = arith.constant 0 : index
    %c0_4 = arith.constant 0 : index
    %c0_5 = arith.constant 0 : index
    %2 = vector.load %arg1[%c0_3, %c0_4, %c0_5] : memref<3x16x128xf32, #tpu.memory_space<vmem>>, vector<3x16x128xf32>
    %3 = vector.shape_cast %2 : vector<3x16x128xf32> to vector<48x128xf32>
    %cst = arith.constant dense<0.000000e+00> : vector<48x128xf32>
    %4 = tpu.matmul %3, %0, %cst {dimension_numbers = #tpu.dot_dimension_numbers<[1], [0], [0], [1], [0, 0, 1, 1], [], []>} : vector<48x128xf32>, vector<128x128xf32>, vector<48x128xf32> -> vector<48x128xf32>
    %5 = vector.broadcast %1 : vector<1x128xf32> to vector<48x128xf32>
    %6 = arith.addf %4, %5 : vector<48x128xf32>
    %cst_6 = arith.constant 0.000000e+00 : f32
    %7 = vector.broadcast %cst_6 : f32 to vector<48x128xf32>
    %8 = arith.maximumf %6, %7 : vector<48x128xf32>
    %c0_7 = arith.constant 0 : index
    %c0_8 = arith.constant 0 : index
    %9 = vector.load %arg5[%c0_7, %c0_8] : memref<128x1xf32, #tpu.memory_space<vmem>>, vector<128x1xf32>
    %cst_9 = arith.constant dense<0.000000e+00> : vector<48x1xf32>
    %10 = tpu.matmul %8, %9, %cst_9 {dimension_numbers = #tpu.dot_dimension_numbers<[1], [0], [0], [1], [0, 0, 1, 1], [], []>} : vector<48x128xf32>, vector<128x1xf32>, vector<48x1xf32> -> vector<48x1xf32>
    %11 = vector.shape_cast %10 : vector<48x1xf32> to vector<3x1x16xf32>
    %c0_10 = arith.constant 0 : index
    %c0_11 = arith.constant 0 : index
    %c0_12 = arith.constant 0 : index
    %12 = vector.load %arg9[%c0_10, %c0_11, %c0_12] : memref<3x1x16xf32, #tpu.memory_space<vmem>>, vector<3x1x16xf32>
    tpu.vector_store %arg9[%c0_10, %c0_11, %c0_12], %11 {strides = array<i32>} : memref<3x1x16xf32, #tpu.memory_space<vmem>>, vector<3x1x16xf32>,
    %c0_13 = arith.constant 0 : index
    %c0_14 = arith.constant 0 : index
    %c0_15 = arith.constant 0 : index
    %13 = vector.load %arg2[%c0_13, %c0_14, %c0_15] : memref<3x1x16xf32, #tpu.memory_space<vmem>>, vector<3x1x16xf32>
    %c0_16 = arith.constant 0 : index
    %c0_17 = arith.constant 0 : index
    %c0_18 = arith.constant 0 : index
    %14 = vector.load %arg9[%c0_16, %c0_17, %c0_18] : memref<3x1x16xf32, #tpu.memory_space<vmem>>, vector<3x1x16xf32>
    %c0_19 = arith.constant 0 : index
    %c0_20 = arith.constant 0 : index
    %15 = memref.load %arg7[%c0_19, %c0_20] : memref<1x1xf32, #tpu.memory_space<smem>>
    %16 = vector.broadcast %15 : f32 to vector<3x1x16xf32>
    %17 = arith.addf %14, %16 : vector<3x1x16xf32>
    %cst_21 = arith.constant 0.000000e+00 : f32
    %18 = vector.broadcast %cst_21 : f32 to vector<3x1x16xf32>
    %19 = arith.cmpf ogt, %13, %18 : vector<3x1x16xf32>
    %cst_22 = arith.constant -1.000000e+30 : f32
    %20 = vector.broadcast %cst_22 : f32 to vector<3x1x16xf32>
    %21 = arith.select %19, %17, %20 : vector<3x1x16xi1>, vector<3x1x16xf32>
    %cst_23 = arith.constant dense<0xFF800000> : vector<3x1xf32>
    %22 = vector.multi_reduction <maximumf>, %21, %cst_23 [2] : vector<3x1x16xf32> to vector<3x1xf32>
    %23 = vector.shape_cast %22 : vector<3x1xf32> to vector<3x1x1xf32>
    %24 = vector.broadcast %23 : vector<3x1x1xf32> to vector<3x1x16xf32>
    %25 = arith.subf %21, %24 : vector<3x1x16xf32>
    %26 = math.exp %25 : vector<3x1x16xf32>
    %27 = arith.mulf %26, %13 : vector<3x1x16xf32>
    %cst_24 = arith.constant dense<0.000000e+00> : vector<3x1xf32>
    %28 = vector.multi_reduction <add>, %27, %cst_24 [2] : vector<3x1x16xf32> to vector<3x1xf32>
    %29 = vector.shape_cast %28 : vector<3x1xf32> to vector<3x1x1xf32>
    %cst_25 = arith.constant 9.99999982E-14 : f32
    %30 = vector.broadcast %cst_25 : f32 to vector<3x1x1xf32>
    %31 = arith.addf %29, %30 : vector<3x1x1xf32>
    %cst_26 = arith.constant 1.000000e+00 : f32
    %32 = vector.broadcast %cst_26 : f32 to vector<3x1x1xf32>
    %33 = arith.divf %32, %31 : vector<3x1x1xf32>
    %34 = vector.broadcast %33 : vector<3x1x1xf32> to vector<3x1x16xf32>
    %35 = arith.mulf %27, %34 : vector<3x1x16xf32>
    %c0_27 = arith.constant 0 : index
    %c0_28 = arith.constant 0 : index
    %c0_29 = arith.constant 0 : index
    %36 = vector.load %arg1[%c0_27, %c0_28, %c0_29] : memref<3x16x128xf32, #tpu.memory_space<vmem>>, vector<3x16x128xf32>
    "tpu.trace_start"() <{level = 10 : i32, message = "bot,bth->boh"}> : () -> ()
    %cst_30 = arith.constant dense<0.000000e+00> : vector<3x1x128xf32>
    %37 = tpu.matmul %35, %36, %cst_30 {dimension_numbers = #tpu.dot_dimension_numbers<[2], [1], [1], [2], [0, 0, 0, 1, 1, 2], [0], [0]>} : vector<3x1x16xf32>, vector<3x16x128xf32>, vector<3x1x128xf32> -> vector<3x1x128xf32>
    "tpu.trace_stop"() : () -> ()
    %38 = vector.shape_cast %37 : vector<3x1x128xf32> to vector<3x128xf32>
    %c0_31 = arith.constant 0 : index
    %c0_32 = arith.constant 0 : index
    %39 = vector.load %arg8[%c0_31, %c0_32] : memref<3x128xf32, #tpu.memory_space<vmem>>, vector<3x128xf32>
    tpu.vector_store %arg8[%c0_31, %c0_32], %38 {strides = array<i32>} : memref<3x128xf32, #tpu.memory_space<vmem>>, vector<3x128xf32>,
    return
  }
  func.func @transform_0(%arg0: i32) -> (i32, i32, i32) {
    %c0_i32 = arith.constant 0 : i32
    %c0_i32_0 = arith.constant 0 : i32
    %c0_i32_1 = arith.constant 0 : i32
    return %arg0, %c0_i32, %c0_i32_0 : i32, i32, i32
  }
  func.func @transform_1(%arg0: i32) -> (i32, i32, i32) {
    %c0_i32 = arith.constant 0 : i32
    %c0_i32_0 = arith.constant 0 : i32
    %c0_i32_1 = arith.constant 0 : i32
    return %arg0, %c0_i32, %c0_i32_0 : i32, i32, i32
  }
  func.func @transform_2(%arg0: i32) -> (i32, i32) {
    %c0_i32 = arith.constant 0 : i32
    %c0_i32_0 = arith.constant 0 : i32
    %c0_i32_1 = arith.constant 0 : i32
    return %c0_i32, %c0_i32_0 : i32, i32
  }
  func.func @transform_3(%arg0: i32) -> (i32, i32) {
    %c0_i32 = arith.constant 0 : i32
    %c0_i32_0 = arith.constant 0 : i32
    %c0_i32_1 = arith.constant 0 : i32
    return %c0_i32, %c0_i32_0 : i32, i32
  }
  func.func @transform_4(%arg0: i32) -> (i32, i32) {
    %c0_i32 = arith.constant 0 : i32
    %c0_i32_0 = arith.constant 0 : i32
    %c0_i32_1 = arith.constant 0 : i32
    return %c0_i32, %c0_i32_0 : i32, i32
  }
  func.func @transform_5(%arg0: i32) -> (i32, i32) {
    %c0_i32 = arith.constant 0 : i32
    %c0_i32_0 = arith.constant 0 : i32
    %c0_i32_1 = arith.constant 0 : i32
    return %c0_i32, %c0_i32_0 : i32, i32
  }
  func.func @transform_6(%arg0: i32) -> (i32, i32) {
    %c0_i32 = arith.constant 0 : i32
    %c0_i32_0 = arith.constant 0 : i32
    %c0_i32_1 = arith.constant 0 : i32
    return %c0_i32, %c0_i32_0 : i32, i32
  }
  func.func @transform_7(%arg0: i32) -> (i32, i32) {
    %c0_i32 = arith.constant 0 : i32
    %c0_i32_0 = arith.constant 0 : i32
    return %arg0, %c0_i32 : i32, i32
  }
}

module attributes {stable_mosaic.version = 11 : i64} {
  func.func @attn_pooling_kernel(%arg0: i32, %arg1: memref<3x16x128xf32, #tpu.memory_space<vmem>>, %arg2: memref<3x1x16xf32, #tpu.memory_space<vmem>>, %arg3: memref<128x128xf32, #tpu.memory_space<vmem>>, %arg4: memref<1x128xf32, #tpu.memory_space<vmem>>, %arg5: memref<128x1xf32, #tpu.memory_space<vmem>>, %arg6: memref<1x128xf32, #tpu.memory_space<vmem>>, %arg7: memref<1x1xf32, #tpu.memory_space<smem>>, %arg8: memref<3x1x128xf32, #tpu.memory_space<vmem>>, %arg9: memref<3x1x16xf32, #tpu.memory_space<vmem>>) attributes {dimension_semantics = [#tpu.dimension_semantics<parallel>], iteration_bounds = array<i64: 1>, scalar_prefetch = 0 : i64, scratch_operands = 1 : i64, tpu.core_type = #tpu.core_type<tc>, window_params = [{transform_indices = @transform_0, window_bounds = array<i64: 3, 16, 128>}, {transform_indices = @transform_1, window_bounds = array<i64: 3, 1, 16>}, {pipeline_mode = #tpu.pipeline_mode<synchronous>, transform_indices = @transform_2, window_bounds = array<i64: 128, 128>}, {pipeline_mode = #tpu.pipeline_mode<synchronous>, transform_indices = @transform_3, window_bounds = array<i64: 1, 128>}, {pipeline_mode = #tpu.pipeline_mode<synchronous>, transform_indices = @transform_4, window_bounds = array<i64: 128, 1>}, {pipeline_mode = #tpu.pipeline_mode<synchronous>, transform_indices = @transform_5, window_bounds = array<i64: 1, 128>}, {transform_indices = @transform_6, window_bounds = array<i64: 1, 1>}, {transform_indices = @transform_7, window_bounds = array<i64: 3, 1, 128>}]} {
    %c0 = arith.constant 0 : index
    %c0_0 = arith.constant 0 : index
    %0 = vector.load %arg3[%c0, %c0_0] : memref<128x128xf32, #tpu.memory_space<vmem>>, vector<128x128xf32>
    %c0_1 = arith.constant 0 : index
    %c0_2 = arith.constant 0 : index
    %1 = vector.load %arg4[%c0_1, %c0_2] : memref<1x128xf32, #tpu.memory_space<vmem>>, vector<1x128xf32>
    %c0_3 = arith.constant 0 : index
    %c0_4 = arith.constant 0 : index
    %c0_5 = arith.constant 0 : index
    %2 = vector.load %arg1[%c0_3, %c0_4, %c0_5] : memref<3x16x128xf32, #tpu.memory_space<vmem>>, vector<3x16x128xf32>
    %3 = vector.shape_cast %2 : vector<3x16x128xf32> to vector<48x128xf32>
    %cst = arith.constant dense<0.000000e+00> : vector<48x128xf32>
    %4 = tpu.matmul %3, %0, %cst {dimension_numbers = #tpu.dot_dimension_numbers<[1], [0], [0], [1], [0, 0, 1, 1], [], []>} : vector<48x128xf32>, vector<128x128xf32>, vector<48x128xf32> -> vector<48x128xf32>
    %5 = vector.broadcast %1 : vector<1x128xf32> to vector<48x128xf32>
    %6 = arith.addf %4, %5 : vector<48x128xf32>
    %cst_6 = arith.constant 0.000000e+00 : f32
    %7 = vector.broadcast %cst_6 : f32 to vector<48x128xf32>
    %8 = arith.maximumf %6, %7 : vector<48x128xf32>
    %9 = vector.shape_cast %8 : vector<48x128xf32> to vector<3x16x128xf32>
    %c0_7 = arith.constant 0 : index
    %c0_8 = arith.constant 0 : index
    %10 = vector.load %arg6[%c0_7, %c0_8] : memref<1x128xf32, #tpu.memory_space<vmem>>, vector<1x128xf32>
    %11 = vector.shape_cast %10 : vector<1x128xf32> to vector<1x1x128xf32>
    %12 = vector.shape_cast %11 : vector<1x1x128xf32> to vector<1x1x128xf32>
    %13 = vector.broadcast %12 : vector<1x1x128xf32> to vector<3x1x128xf32>
    "tpu.trace_start"() <{level = 10 : i32, message = "bod,btd->bot"}> : () -> ()
    %cst_9 = arith.constant dense<0.000000e+00> : vector<3x1x16xf32>
    %14 = tpu.matmul %13, %9, %cst_9 {dimension_numbers = #tpu.dot_dimension_numbers<[2], [2], [1], [1], [0, 0, 0, 1, 1, 1], [0], [0]>} : vector<3x1x128xf32>, vector<3x16x128xf32>, vector<3x1x16xf32> -> vector<3x1x16xf32>
    "tpu.trace_stop"() : () -> ()
    %c0_10 = arith.constant 0 : index
    %c0_11 = arith.constant 0 : index
    %c0_12 = arith.constant 0 : index
    %15 = vector.load %arg9[%c0_10, %c0_11, %c0_12] : memref<3x1x16xf32, #tpu.memory_space<vmem>>, vector<3x1x16xf32>
    tpu.vector_store %arg9[%c0_10, %c0_11, %c0_12], %14 {strides = array<i32>} : memref<3x1x16xf32, #tpu.memory_space<vmem>>, vector<3x1x16xf32>,
    %c0_13 = arith.constant 0 : index
    %c0_14 = arith.constant 0 : index
    %c0_15 = arith.constant 0 : index
    %16 = vector.load %arg2[%c0_13, %c0_14, %c0_15] : memref<3x1x16xf32, #tpu.memory_space<vmem>>, vector<3x1x16xf32>
    %c0_16 = arith.constant 0 : index
    %c0_17 = arith.constant 0 : index
    %c0_18 = arith.constant 0 : index
    %17 = vector.load %arg9[%c0_16, %c0_17, %c0_18] : memref<3x1x16xf32, #tpu.memory_space<vmem>>, vector<3x1x16xf32>
    %c0_19 = arith.constant 0 : index
    %c0_20 = arith.constant 0 : index
    %18 = memref.load %arg7[%c0_19, %c0_20] : memref<1x1xf32, #tpu.memory_space<smem>>
    %19 = vector.broadcast %18 : f32 to vector<3x1x16xf32>
    %20 = arith.addf %17, %19 : vector<3x1x16xf32>
    %cst_21 = arith.constant 0.000000e+00 : f32
    %21 = vector.broadcast %cst_21 : f32 to vector<3x1x16xf32>
    %22 = arith.cmpf ogt, %16, %21 : vector<3x1x16xf32>
    %cst_22 = arith.constant -1.000000e+30 : f32
    %23 = vector.broadcast %cst_22 : f32 to vector<3x1x16xf32>
    %24 = arith.select %22, %20, %23 : vector<3x1x16xi1>, vector<3x1x16xf32>
    %cst_23 = arith.constant dense<0xFF800000> : vector<3x1xf32>
    %25 = vector.multi_reduction <maximumf>, %24, %cst_23 [2] : vector<3x1x16xf32> to vector<3x1xf32>
    %26 = vector.shape_cast %25 : vector<3x1xf32> to vector<3x1x1xf32>
    %27 = vector.broadcast %26 : vector<3x1x1xf32> to vector<3x1x16xf32>
    %28 = arith.subf %24, %27 : vector<3x1x16xf32>
    %29 = math.exp %28 : vector<3x1x16xf32>
    %30 = arith.mulf %29, %16 : vector<3x1x16xf32>
    %cst_24 = arith.constant dense<0.000000e+00> : vector<3x1xf32>
    %31 = vector.multi_reduction <add>, %30, %cst_24 [2] : vector<3x1x16xf32> to vector<3x1xf32>
    %32 = vector.shape_cast %31 : vector<3x1xf32> to vector<3x1x1xf32>
    %cst_25 = arith.constant 9.99999982E-14 : f32
    %33 = vector.broadcast %cst_25 : f32 to vector<3x1x1xf32>
    %34 = arith.addf %32, %33 : vector<3x1x1xf32>
    %cst_26 = arith.constant 1.000000e+00 : f32
    %35 = vector.broadcast %cst_26 : f32 to vector<3x1x1xf32>
    %36 = arith.divf %35, %34 : vector<3x1x1xf32>
    %37 = vector.broadcast %36 : vector<3x1x1xf32> to vector<3x1x16xf32>
    %38 = arith.mulf %30, %37 : vector<3x1x16xf32>
    %c0_27 = arith.constant 0 : index
    %c0_28 = arith.constant 0 : index
    %c0_29 = arith.constant 0 : index
    %39 = vector.load %arg1[%c0_27, %c0_28, %c0_29] : memref<3x16x128xf32, #tpu.memory_space<vmem>>, vector<3x16x128xf32>
    "tpu.trace_start"() <{level = 10 : i32, message = "bot,bth->boh"}> : () -> ()
    %cst_30 = arith.constant dense<0.000000e+00> : vector<3x1x128xf32>
    %40 = tpu.matmul %38, %39, %cst_30 {dimension_numbers = #tpu.dot_dimension_numbers<[2], [1], [1], [2], [0, 0, 0, 1, 1, 2], [0], [0]>} : vector<3x1x16xf32>, vector<3x16x128xf32>, vector<3x1x128xf32> -> vector<3x1x128xf32>
    "tpu.trace_stop"() : () -> ()
    %c0_31 = arith.constant 0 : index
    %c0_32 = arith.constant 0 : index
    %c0_33 = arith.constant 0 : index
    %41 = vector.load %arg8[%c0_31, %c0_32, %c0_33] : memref<3x1x128xf32, #tpu.memory_space<vmem>>, vector<3x1x128xf32>
    tpu.vector_store %arg8[%c0_31, %c0_32, %c0_33], %40 {strides = array<i32>} : memref<3x1x128xf32, #tpu.memory_space<vmem>>, vector<3x1x128xf32>,
    return
  }
  func.func @transform_0(%arg0: i32) -> (i32, i32, i32) {
    %c0_i32 = arith.constant 0 : i32
    %c0_i32_0 = arith.constant 0 : i32
    %c0_i32_1 = arith.constant 0 : i32
    return %arg0, %c0_i32, %c0_i32_0 : i32, i32, i32
  }
  func.func @transform_1(%arg0: i32) -> (i32, i32, i32) {
    %c0_i32 = arith.constant 0 : i32
    %c0_i32_0 = arith.constant 0 : i32
    %c0_i32_1 = arith.constant 0 : i32
    return %arg0, %c0_i32, %c0_i32_0 : i32, i32, i32
  }
  func.func @transform_2(%arg0: i32) -> (i32, i32) {
    %c0_i32 = arith.constant 0 : i32
    %c0_i32_0 = arith.constant 0 : i32
    %c0_i32_1 = arith.constant 0 : i32
    return %c0_i32, %c0_i32_0 : i32, i32
  }
  func.func @transform_3(%arg0: i32) -> (i32, i32) {
    %c0_i32 = arith.constant 0 : i32
    %c0_i32_0 = arith.constant 0 : i32
    %c0_i32_1 = arith.constant 0 : i32
    return %c0_i32, %c0_i32_0 : i32, i32
  }
  func.func @transform_4(%arg0: i32) -> (i32, i32) {
    %c0_i32 = arith.constant 0 : i32
    %c0_i32_0 = arith.constant 0 : i32
    %c0_i32_1 = arith.constant 0 : i32
    return %c0_i32, %c0_i32_0 : i32, i32
  }
  func.func @transform_5(%arg0: i32) -> (i32, i32) {
    %c0_i32 = arith.constant 0 : i32
    %c0_i32_0 = arith.constant 0 : i32
    %c0_i32_1 = arith.constant 0 : i32
    return %c0_i32, %c0_i32_0 : i32, i32
  }
  func.func @transform_6(%arg0: i32) -> (i32, i32) {
    %c0_i32 = arith.constant 0 : i32
    %c0_i32_0 = arith.constant 0 : i32
    %c0_i32_1 = arith.constant 0 : i32
    return %c0_i32, %c0_i32_0 : i32, i32
  }
  func.func @transform_7(%arg0: i32) -> (i32, i32, i32) {
    %c0_i32 = arith.constant 0 : i32
    %c0_i32_0 = arith.constant 0 : i32
    %c0_i32_1 = arith.constant 0 : i32
    return %arg0, %c0_i32, %c0_i32_0 : i32, i32, i32
  }
}

</mosaic_0001>

<llo_original>
// kernel: tpu_custom_call.1
$region0: #{tpu_custom_call.1}
  #allocation0 [shape = 'u32[]', space=smem, size = 0x4, offset = 0x4, fixed_abs, tag = 'smem constant byte address 0x4 - core index']
  #allocation1 [shape = 'u32[72,128]{1,0:T(1,128)}', space=vmem, size = 0x9000, scoped, tag = 'internal scratch']
  #allocation2 [shape = 'f32[3,1,16]{2,1,0:T(1,128)}', space=vmem, size = 0x600, scoped, tag = 'scratch operand']
  #allocation3 [shape = 'f32[1,1]{1,0:T(1,128)S(6)}', space=smem, size = 0x200, scoped, tag = 'scoped memory for tpu_custom_call.1']
  %s0 = inlined_call_operand.hbm [shape: f32[3,16,128], index: 0, kind: input, shape index: {}]
  %s1 = inlined_call_operand.hbm [shape: f32[3,1,16], index: 1, kind: input, shape index: {}]
  %s2 = inlined_call_operand.vmem [shape: f32[128,128], index: 2, kind: input, shape index: {}]
  %s3 = inlined_call_operand.vmem [shape: f32[1,128], index: 3, kind: input, shape index: {}]
  %s4 = inlined_call_operand.vmem [shape: f32[128,1], index: 4, kind: input, shape index: {}]
  %s5 = inlined_call_operand.vmem [shape: f32[1,128], index: 5, kind: input, shape index: {}]
  %s6 = inlined_call_operand.<no memory space> [shape: f32[1,1], index: 6, kind: input, shape index: {}]
  %s7 = inlined_call_operand.hbm [shape: f32[3,128], index: 7, kind: output, shape index: {}]
  %s8 = sld [smem:[#allocation0]]
  $region46: #{tpu_custom_call.1} parent=0
    _
  %s10 = ssub.s32 1, %s8
  %s11 = scalar_select 0, %s10, %s8
  %12 = sst [smem:[#allocation3]] %s6
  $region1: #{tpu_custom_call.1} parent=0
    #allocation4 [shape = 'u8[24576]{0}', space=vmem, size = 0x6000, scoped, tag = 'input window, operand 0, single buffered']
    #allocation5 [shape = 's32[1]{0}', space=sflag, size = 0x4, scoped, tag = 'scoped memory for tpu_custom_call.1']
    #allocation6 [shape = 's32[1]{0}', space=sflag, size = 0x4, scoped, tag = 'scoped memory for tpu_custom_call.1']
    #allocation7 [shape = 'u8[1536]{0}', space=vmem, size = 0x800, scoped, tag = 'input window, operand 1, single buffered']
    #allocation8 [shape = 's32[1]{0}', space=sflag, size = 0x4, scoped, tag = 'scoped memory for tpu_custom_call.1']
    #allocation9 [shape = 'u8[2048]{0}', space=vmem, size = 0x800, scoped, tag = 'output window, operand 0, single buffered']
    %13 = vsyncpa [#allocation5], 0
    %14 = vsyncpa [#allocation8], 0
    %15 = vsyncpa [#allocation6], 0
    // Predicated region
    $region2: #{tpu_custom_call.1} parent=1 // pred_check
      _
    $region3: #{tpu_custom_call.1} parent=1 // pred_check_branch
      %17 = sbr.rel (0) target = $region5
    $region4: #{tpu_custom_call.1} parent=1 // pred_region
      %19 = vsyncadd [#allocation5], 0
      %s20 = sshll.u32 %s0, 4
      %s21 = int_to_ptr.hbm [resolvable:$true] %s20
      %s22 = sshll.u32 [#allocation4], 4
      %s23 = int_to_ptr.vmem [resolvable:$true] %s22
      %28 = dma.hbm_to_vmem [thread:$0]  %s21, 768, %s23, [#allocation5], 128, 128, 8
    $region5: #{tpu_custom_call.1} parent=1 // pred_fallthru
      _
    // Predicated region
    $region6: #{tpu_custom_call.1} parent=1 // pred_check
      _
    $region7: #{tpu_custom_call.1} parent=1 // pred_check_branch
      %30 = sbr.rel (0) target = $region9
    $region8: #{tpu_custom_call.1} parent=1 // pred_region
      %32 = vsyncadd [#allocation8], 0
      %s33 = sshll.u32 %s1, 4
      %s34 = int_to_ptr.hbm [resolvable:$true] %s33
      %s35 = sshll.u32 [#allocation7], 4
      %s36 = int_to_ptr.vmem [resolvable:$true] %s35
      %41 = dma.hbm_to_vmem [thread:$0]  %s34, 48, %s36, [#allocation8], 16, 16, 1
    $region9: #{tpu_custom_call.1} parent=1 // pred_fallthru
      _
    // Predicated region
    $region10: #{tpu_custom_call.1} parent=1 // pred_check
      _
    $region11: #{tpu_custom_call.1} parent=1 // pred_check_branch
      %43 = sbr.rel (0) target = $region13
    $region12: #{tpu_custom_call.1} parent=1 // pred_region
      _
    $region13: #{tpu_custom_call.1} parent=1 // pred_fallthru
      _
    // Predicated region
    $region14: #{tpu_custom_call.1} parent=1 // pred_check
      _
    $region15: #{tpu_custom_call.1} parent=1 // pred_check_branch
      %45 = sbr.rel (0) target = $region17
    $region16: #{tpu_custom_call.1} parent=1 // pred_region
      _
    $region17: #{tpu_custom_call.1} parent=1 // pred_fallthru
      _
    // Predicated region
    $region18: #{tpu_custom_call.1} parent=1 // pred_check
      _
    $region19: #{tpu_custom_call.1} parent=1 // pred_check_branch
      %47 = sbr.rel (0) target = $region21
    $region20: #{tpu_custom_call.1} parent=1 // pred_region
      _
    $region21: #{tpu_custom_call.1} parent=1 // pred_fallthru
      _
    // Predicated region
    $region22: #{tpu_custom_call.1} parent=1 // pred_check
      _
    $region23: #{tpu_custom_call.1} parent=1 // pred_check_branch
      %49 = sbr.rel (0) target = $region25
    $region24: #{tpu_custom_call.1} parent=1 // pred_region
      _
    $region25: #{tpu_custom_call.1} parent=1 // pred_fallthru
      _
    // Predicated region
    $region26: #{tpu_custom_call.1} parent=1 // pred_check
      _
    $region27: #{tpu_custom_call.1} parent=1 // pred_check_branch
      %51 = sbr.rel (0) target = $region29
    $region28: #{tpu_custom_call.1} parent=1 // pred_region
      _
    $region29: #{tpu_custom_call.1} parent=1 // pred_fallthru
      _
    // Predicated region
    $region30: #{tpu_custom_call.1} parent=1 // pred_check
      _
    $region31: #{tpu_custom_call.1} parent=1 // pred_check_branch
      %53 = sbr.rel (0) target = $region33
    $region32: #{tpu_custom_call.1} parent=1 // pred_region
      %55 = dma.done [#allocation5], 768
    $region33: #{tpu_custom_call.1} parent=1 // pred_fallthru
      _
    // Predicated region
    $region34: #{tpu_custom_call.1} parent=1 // pred_check
      _
    $region35: #{tpu_custom_call.1} parent=1 // pred_check_branch
      %57 = sbr.rel (0) target = $region37
    $region36: #{tpu_custom_call.1} parent=1 // pred_region
      %59 = dma.done [#allocation8], 48
    $region37: #{tpu_custom_call.1} parent=1 // pred_fallthru
      _
    %v60 = vld [vmem:[%s2] sm:$0xff]
    %v61 = vld [vmem:[%s2 + $0x8] sm:$0xff]
    %v62 = vld [vmem:[%s2 + $0x10] sm:$0xff]
    %v63 = vld [vmem:[%s2 + $0x18] sm:$0xff]
    %v64 = vld [vmem:[%s2 + $0x20] sm:$0xff]
    %v65 = vld [vmem:[%s2 + $0x28] sm:$0xff]
    %v66 = vld [vmem:[%s2 + $0x30] sm:$0xff]
    %v67 = vld [vmem:[%s2 + $0x38] sm:$0xff]
    %v68 = vld [vmem:[%s2 + $0x40] sm:$0xff]
    %v69 = vld [vmem:[%s2 + $0x48] sm:$0xff]
    %v70 = vld [vmem:[%s2 + $0x50] sm:$0xff]
    %v71 = vld [vmem:[%s2 + $0x58] sm:$0xff]
    %v72 = vld [vmem:[%s2 + $0x60] sm:$0xff]
    %v73 = vld [vmem:[%s2 + $0x68] sm:$0xff]
    %v74 = vld [vmem:[%s2 + $0x70] sm:$0xff]
    %v75 = vld [vmem:[%s2 + $0x78] sm:$0xff]
    %v76 = vld [vmem:[%s3] sm:$0x1]
    %v77 = vld [vmem:[#allocation4] sm:$0xff]
    %v78 = vld [vmem:[#allocation4 + $0x8] sm:$0xff]
    %v79 = vld [vmem:[#allocation4 + $0x10] sm:$0xff]
    %v80 = vld [vmem:[#allocation4 + $0x18] sm:$0xff]
    %v81 = vld [vmem:[#allocation4 + $0x20] sm:$0xff]
    %v82 = vld [vmem:[#allocation4 + $0x28] sm:$0xff]
    %v84 = vperm.slane %v76, 0
    %86 = vmatpush.msra.mxu0 %v75
    %87 = vmatpush.msra.mxu0 %v74
    %88 = vmatpush.msra.mxu0 %v73
    %89 = vmatpush.msra.mxu0 %v72
    %90 = vmatpush.msra.mxu0 %v71
    %91 = vmatpush.msra.mxu0 %v70
    %92 = vmatpush.msra.mxu0 %v69
    %93 = vmatpush.msra.mxu0 %v68
    %94 = vmatpush.msra.mxu0 %v67
    %95 = vmatpush.msra.mxu0 %v66
    %96 = vmatpush.msra.mxu0 %v65
    %97 = vmatpush.msra.mxu0 %v64
    %98 = vmatpush.msra.mxu0 %v63
    %99 = vmatpush.msra.mxu0 %v62
    %100 = vmatpush.msra.mxu0 %v61
    %101 = vmatpush.msra.mxu0 %v60
    %102 = vmatmul.f32.gmra.mxu0 %v77
    %v103 = vpop.f32.mrf.mxu0
    %v104 = vadd.f32 %v84, %v103
    %105 = vmatmul.f32.gmra.mxu0 %v78
    %v106 = vpop.f32.mrf.mxu0
    %v107 = vadd.f32 %v84, %v106
    %108 = vmatmul.f32.gmra.mxu0 %v79
    %v109 = vpop.f32.mrf.mxu0
    %v110 = vadd.f32 %v84, %v109
    %111 = vmatmul.f32.gmra.mxu0 %v80
    %v112 = vpop.f32.mrf.mxu0
    %v113 = vadd.f32 %v84, %v112
    %114 = vmatmul.f32.gmra.mxu0 %v81
    %v115 = vpop.f32.mrf.mxu0
    %v116 = vadd.f32 %v84, %v115
    %117 = vmatmul.f32.gmra.mxu0 %v82
    %v118 = vpop.f32.mrf.mxu0
    %v119 = vadd.f32 %v84, %v118
    %120 = vdwg.mxu0
    %v121 = vmax.f32 %v104, 0.0
    %v122 = vmax.f32 %v107, 0.0
    %v123 = vmax.f32 %v110, 0.0
    %v124 = vmax.f32 %v113, 0.0
    %v125 = vmax.f32 %v116, 0.0
    %v126 = vmax.f32 %v119, 0.0
    %v127 = vld [vmem:[%s4] sm:$0xff]
    %v128 = vld [vmem:[%s4 + $0x8] sm:$0xff]
    %v129 = vld [vmem:[%s4 + $0x10] sm:$0xff]
    %v130 = vld [vmem:[%s4 + $0x18] sm:$0xff]
    %v131 = vld [vmem:[%s4 + $0x20] sm:$0xff]
    %v132 = vld [vmem:[%s4 + $0x28] sm:$0xff]
    %v133 = vld [vmem:[%s4 + $0x30] sm:$0xff]
    %v134 = vld [vmem:[%s4 + $0x38] sm:$0xff]
    %v135 = vld [vmem:[%s4 + $0x40] sm:$0xff]
    %v136 = vld [vmem:[%s4 + $0x48] sm:$0xff]
    %v137 = vld [vmem:[%s4 + $0x50] sm:$0xff]
    %v138 = vld [vmem:[%s4 + $0x58] sm:$0xff]
    %v139 = vld [vmem:[%s4 + $0x60] sm:$0xff]
    %v140 = vld [vmem:[%s4 + $0x68] sm:$0xff]
    %v141 = vld [vmem:[%s4 + $0x70] sm:$0xff]
    %v142 = vld [vmem:[%s4 + $0x78] sm:$0xff]
    %143 = vmatpush.msra.mxu0 %v142
    %144 = vmatpush.msra.mxu0 %v141
    %145 = vmatpush.msra.mxu0 %v140
    %146 = vmatpush.msra.mxu0 %v139
    %147 = vmatpush.msra.mxu0 %v138
    %148 = vmatpush.msra.mxu0 %v137
    %149 = vmatpush.msra.mxu0 %v136
    %150 = vmatpush.msra.mxu0 %v135
    %151 = vmatpush.msra.mxu0 %v134
    %152 = vmatpush.msra.mxu0 %v133
    %153 = vmatpush.msra.mxu0 %v132
    %154 = vmatpush.msra.mxu0 %v131
    %155 = vmatpush.msra.mxu0 %v130
    %156 = vmatpush.msra.mxu0 %v129
    %157 = vmatpush.msra.mxu0 %v128
    %158 = vmatpush.msra.mxu0 %v127
    %159 = vmatmul.f32.gmra.mxu0 %v121
    %v160 = vpop.f32.mrf.mxu0
    %v161 = vadd.f32 0.0, %v160
    %162 = vmatmul.f32.gmra.mxu0 %v122
    %v163 = vpop.f32.mrf.mxu0
    %v164 = vadd.f32 0.0, %v163
    %165 = vmatmul.f32.gmra.mxu0 %v123
    %v166 = vpop.f32.mrf.mxu0
    %v167 = vadd.f32 0.0, %v166
    %168 = vmatmul.f32.gmra.mxu0 %v124
    %v169 = vpop.f32.mrf.mxu0
    %v170 = vadd.f32 0.0, %v169
    %171 = vmatmul.f32.gmra.mxu0 %v125
    %v172 = vpop.f32.mrf.mxu0
    %v173 = vadd.f32 0.0, %v172
    %174 = vmatmul.f32.gmra.mxu0 %v126
    %v175 = vpop.f32.mrf.mxu0
    %v176 = vadd.f32 0.0, %v175
    %177 = vdwg.mxu0
    %184 = vset.pattern.permute.xlu0 0
    %185 = vperm.xlu0 %184, %v161
    %v186 = vpop.permute.xlu0 %185
    %187 = vset.pattern.permute.xlu0 0
    %188 = vperm.xlu0 %187, %v164
    %v189 = vpop.permute.xlu0 %188
    %190 = vset.pattern.permute.xlu0 0
    %191 = vperm.xlu0 %190, %v167
    %v192 = vpop.permute.xlu0 %191
    %193 = vset.pattern.permute.xlu0 0
    %194 = vperm.xlu0 %193, %v170
    %v195 = vpop.permute.xlu0 %194
    %196 = vset.pattern.permute.xlu0 0
    %197 = vperm.xlu0 %196, %v173
    %v198 = vpop.permute.xlu0 %197
    %199 = vset.pattern.permute.xlu0 0
    %200 = vperm.xlu0 %199, %v176
    %v201 = vpop.permute.xlu0 %200
    %v202 = vlaneseq
    %v203 = vand.u32 %v202, 127
    %v204 = vperm.slane %v186, %v203
    %v205 = vadd.s32 %v203, 4294967288
    %v206 = vperm.slane %v189, %v205
    %vm207 = vcmask 130112
    %v208 = vsel %vm207, %v206, %v204
    %v209 = vperm.slane %v192, %v203
    %v210 = vperm.slane %v195, %v205
    %v211 = vsel %vm207, %v210, %v209
    %v212 = vperm.slane %v198, %v203
    %v213 = vperm.slane %v201, %v205
    %v214 = vsel %vm207, %v213, %v212
    %vm218 = vcmask 122880
    %219 = vst.msk [vmem:[#allocation2] sm:$0x1] %vm218, %v208
    %220 = vst.msk [vmem:[#allocation2 + $0x1] sm:$0x1] %vm218, %v211
    %221 = vst.msk [vmem:[#allocation2 + $0x2] sm:$0x1] %vm218, %v214
    %v222 = vld [vmem:[#allocation7] sm:$0x1]
    %v223 = vld [vmem:[#allocation7 + $0x1] sm:$0x1]
    %v224 = vld [vmem:[#allocation7 + $0x2] sm:$0x1]
    %v225 = vld [vmem:[#allocation2] sm:$0x1]
    %v226 = vld [vmem:[#allocation2 + $0x1] sm:$0x1]
    %v227 = vld [vmem:[#allocation2 + $0x2] sm:$0x1]
    %s228 = sld [smem:[#allocation3]]
    %v229 = vstv %s228
    %v230 = vadd.f32 %v225, %v229
    %v231 = vadd.f32 %v226, %v229
    %v232 = vadd.f32 %v227, %v229
    %vm233 = vcmp.gt.f32.partialorder %v222, 0.0
    %vm234 = vcmp.gt.f32.partialorder %v223, 0.0
    %vm235 = vcmp.gt.f32.partialorder %v224, 0.0
    %v236 = vsel %vm233, %v230, -1e+30
    %v237 = vsel %vm234, %v231, -1e+30
    %v238 = vsel %vm235, %v232, -1e+30
    %v239 = vsel %vm218, %v236, -inf
    %240 = vmax.xlane.f32.xlu0 %v239
    %v241 = vpop.xlane.xlu0 %240
    %v242 = vsel %vm218, %v237, -inf
    %243 = vmax.xlane.f32.xlu0 %v242
    %v244 = vpop.xlane.xlu0 %243
    %v245 = vsel %vm218, %v238, -inf
    %246 = vmax.xlane.f32.xlu0 %v245
    %v247 = vpop.xlane.xlu0 %246
    %v248 = vsub.f32 %v236, %v241
    %v249 = vsub.f32 %v237, %v244
    %v250 = vsub.f32 %v238, %v247
    %v251 = vmul.f32 %v248, 1.442695
    %v252 = vpow.pop %v251
    %v253 = vmul.f32 %v249, 1.442695
    %v254 = vpow.pop %v253
    %v255 = vmul.f32 %v250, 1.442695
    %v256 = vpow.pop %v255
    %v257 = vmul.f32 %v252, %v222
    %v258 = vmul.f32 %v254, %v223
    %v259 = vmul.f32 %v256, %v224
    %v260 = vsel %vm218, %v257, 0.0
    %261 = vadd.xlane.f32.xlu0 %v260
    %v262 = vpop.xlane.xlu0 %261
    %v263 = vsel %vm218, %v258, 0.0
    %264 = vadd.xlane.f32.xlu0 %v263
    %v265 = vpop.xlane.xlu0 %264
    %v266 = vsel %vm218, %v259, 0.0
    %267 = vadd.xlane.f32.xlu0 %v266
    %v268 = vpop.xlane.xlu0 %267
    %v269 = vadd.f32 %v262, 1e-13
    %v270 = vadd.f32 %v265, 1e-13
    %v271 = vadd.f32 %v268, 1e-13
    %v272 = vrcp.pop %v269
    %v273 = vmul.f32 %v269, %v272
    %v274 = vsub.f32 1.0, %v273
    %v275 = vmul.f32 %v272, %v274
    %v276 = vadd.f32 %v272, %v275
    %vm277 = vweird.f32 %v269
    %vm278 = vweird.f32 %v272
    %vm279 = vmor %vm277, %vm278
    %v280 = vsel %vm279, %v272, %v276
    %v281 = vand.u32 2147483647, %v269
    %vm282 = vcmp.eq.f32.partialorder %v281, 8.507059e+37
    %v283 = vand.u32 %v269, 2147483648
    %v284 = vor.u32 1.1754944e-38, %v283
    %v285 = vsel %vm282, %v284, %v280
    %v286 = vmul.f32 1.0, %v285
    %v287 = vrcp.pop %v270
    %v288 = vmul.f32 %v270, %v287
    %v289 = vsub.f32 1.0, %v288
    %v290 = vmul.f32 %v287, %v289
    %v291 = vadd.f32 %v287, %v290
    %vm292 = vweird.f32 %v270
    %vm293 = vweird.f32 %v287
    %vm294 = vmor %vm292, %vm293
    %v295 = vsel %vm294, %v287, %v291
    %v296 = vand.u32 2147483647, %v270
    %vm297 = vcmp.eq.f32.partialorder %v296, 8.507059e+37
    %v298 = vand.u32 %v270, 2147483648
    %v299 = vor.u32 1.1754944e-38, %v298
    %v300 = vsel %vm297, %v299, %v295
    %v301 = vmul.f32 1.0, %v300
    %v302 = vrcp.pop %v271
    %v303 = vmul.f32 %v271, %v302
    %v304 = vsub.f32 1.0, %v303
    %v305 = vmul.f32 %v302, %v304
    %v306 = vadd.f32 %v302, %v305
    %vm307 = vweird.f32 %v271
    %vm308 = vweird.f32 %v302
    %vm309 = vmor %vm307, %vm308
    %v310 = vsel %vm309, %v302, %v306
    %v311 = vand.u32 2147483647, %v271
    %vm312 = vcmp.eq.f32.partialorder %v311, 8.507059e+37
    %v313 = vand.u32 %v271, 2147483648
    %v314 = vor.u32 1.1754944e-38, %v313
    %v315 = vsel %vm312, %v314, %v310
    %v316 = vmul.f32 1.0, %v315
    %v317 = vmul.f32 %v257, %v286
    %v318 = vmul.f32 %v258, %v301
    %v319 = vmul.f32 %v259, %v316
    %v320 = vld [vmem:[#allocation4] sm:$0xff]
    %v321 = vld [vmem:[#allocation4 + $0x8] sm:$0xff]
    %v322 = vld [vmem:[#allocation4 + $0x10] sm:$0xff]
    %v323 = vld [vmem:[#allocation4 + $0x18] sm:$0xff]
    %v324 = vld [vmem:[#allocation4 + $0x20] sm:$0xff]
    %v325 = vld [vmem:[#allocation4 + $0x28] sm:$0xff]
    %vm326 = vcmask 130048
    %v328 = vsel %vm326, %v317, 0
    %330 = vmatpush.msra.mxu0 0.0
    %331 = vmatpush.msra.mxu0 0.0
    %332 = vmatpush.msra.mxu0 0.0
    %333 = vmatpush.msra.mxu0 0.0
    %334 = vmatpush.msra.mxu0 0.0
    %335 = vmatpush.msra.mxu0 0.0
    %336 = vmatpush.msra.mxu0 0.0
    %337 = vmatpush.msra.mxu0 0.0
    %338 = vmatpush.msra.mxu0 0.0
    %339 = vmatpush.msra.mxu0 0.0
    %340 = vmatpush.msra.mxu0 0.0
    %341 = vmatpush.msra.mxu0 0.0
    %342 = vmatpush.msra.mxu0 0.0
    %343 = vmatpush.msra.mxu0 0.0
    %344 = vmatpush.msra.mxu0 %v321
    %345 = vmatpush.msra.mxu0 %v320
    %346 = vmatmul.f32.gmra.mxu0 %v328
    %v347 = vpop.f32.mrf.mxu0
    %v348 = vadd.f32 0.0, %v347
    %349 = vdwg.mxu0
    %v351 = vsel %vm326, %v318, 0
    %353 = vmatpush.msra.mxu0 0.0
    %354 = vmatpush.msra.mxu0 0.0
    %355 = vmatpush.msra.mxu0 0.0
    %356 = vmatpush.msra.mxu0 0.0
    %357 = vmatpush.msra.mxu0 0.0
    %358 = vmatpush.msra.mxu0 0.0
    %359 = vmatpush.msra.mxu0 0.0
    %360 = vmatpush.msra.mxu0 0.0
    %361 = vmatpush.msra.mxu0 0.0
    %362 = vmatpush.msra.mxu0 0.0
    %363 = vmatpush.msra.mxu0 0.0
    %364 = vmatpush.msra.mxu0 0.0
    %365 = vmatpush.msra.mxu0 0.0
    %366 = vmatpush.msra.mxu0 0.0
    %367 = vmatpush.msra.mxu0 %v323
    %368 = vmatpush.msra.mxu0 %v322
    %369 = vmatmul.f32.gmra.mxu0 %v351
    %v370 = vpop.f32.mrf.mxu0
    %v371 = vadd.f32 0.0, %v370
    %372 = vdwg.mxu0
    %v374 = vsel %vm326, %v319, 0
    %376 = vmatpush.msra.mxu0 0.0
    %377 = vmatpush.msra.mxu0 0.0
    %378 = vmatpush.msra.mxu0 0.0
    %379 = vmatpush.msra.mxu0 0.0
    %380 = vmatpush.msra.mxu0 0.0
    %381 = vmatpush.msra.mxu0 0.0
    %382 = vmatpush.msra.mxu0 0.0
    %383 = vmatpush.msra.mxu0 0.0
    %384 = vmatpush.msra.mxu0 0.0
    %385 = vmatpush.msra.mxu0 0.0
    %386 = vmatpush.msra.mxu0 0.0
    %387 = vmatpush.msra.mxu0 0.0
    %388 = vmatpush.msra.mxu0 0.0
    %389 = vmatpush.msra.mxu0 0.0
    %390 = vmatpush.msra.mxu0 %v325
    %391 = vmatpush.msra.mxu0 %v324
    %392 = vmatmul.f32.gmra.mxu0 %v374
    %v393 = vpop.f32.mrf.mxu0
    %v394 = vadd.f32 0.0, %v393
    %395 = vdwg.mxu0
    %v399 = vrot.slane %v371, 7
    %vm400 = vcmask 1041409
    %v401 = vsel %vm400, %v399, %v348
    %v402 = vrot.slane %v394, 6
    %vm403 = vcmask 1042434
    %v404 = vsel %vm403, %v402, %v401
    %406 = vst [vmem:[#allocation9] sm:$0x7] %v404
    // Predicated region
    $region38: #{tpu_custom_call.1} parent=1 // pred_check
      _
    $region39: #{tpu_custom_call.1} parent=1 // pred_check_branch
      %408 = sbr.rel (0) target = $region41
    $region40: #{tpu_custom_call.1} parent=1 // pred_region
      %410 = vsyncadd [#allocation6], 0
      %s412 = sshll.u32 [#allocation9], 4
      %s413 = int_to_ptr.vmem [resolvable:$true] %s412
      %s414 = sshll.u32 %s7, 4
      %s415 = int_to_ptr.hbm [resolvable:$true] %s414
      %417 = dma.vmem_to_hbm [thread:$0]  %s413, 64, %s415, [#allocation6]
    $region41: #{tpu_custom_call.1} parent=1 // pred_fallthru
      _
    // Predicated region
    $region42: #{tpu_custom_call.1} parent=1 // pred_check
      _
    $region43: #{tpu_custom_call.1} parent=1 // pred_check_branch
      %419 = sbr.rel (0) target = $region45
    $region44: #{tpu_custom_call.1} parent=1 // pred_region
      %421 = dma.done [#allocation6], 64
    $region45: #{tpu_custom_call.1} parent=1 // pred_fallthru
      _
    %422 = vsyncpa [#allocation5], 1
    %423 = vsyncpa [#allocation8], 1
    %424 = vsyncpa [#allocation6], 1

// kernel: tpu_custom_call.1
$region0: #{tpu_custom_call.1}
  #allocation0 [shape = 'u32[]', space=smem, size = 0x4, offset = 0x4, fixed_abs, tag = 'smem constant byte address 0x4 - core index']
  #allocation1 [shape = 'u32[72,128]{1,0:T(1,128)}', space=vmem, size = 0x9000, scoped, tag = 'internal scratch']
  #allocation2 [shape = 'f32[3,1,16]{2,1,0:T(1,128)}', space=vmem, size = 0x600, scoped, tag = 'scratch operand']
  #allocation3 [shape = 'f32[1,1]{1,0:T(1,128)S(6)}', space=smem, size = 0x200, scoped, tag = 'scoped memory for tpu_custom_call.1']
  %s0 = inlined_call_operand.hbm [shape: f32[3,16,128], index: 0, kind: input, shape index: {}]
  %s1 = inlined_call_operand.hbm [shape: f32[3,1,16], index: 1, kind: input, shape index: {}]
  %s2 = inlined_call_operand.vmem [shape: f32[128,128], index: 2, kind: input, shape index: {}]
  %s3 = inlined_call_operand.vmem [shape: f32[1,128], index: 3, kind: input, shape index: {}]
  %s4 = inlined_call_operand.vmem [shape: f32[128,1], index: 4, kind: input, shape index: {}]
  %s5 = inlined_call_operand.vmem [shape: f32[1,128], index: 5, kind: input, shape index: {}]
  %s6 = inlined_call_operand.<no memory space> [shape: f32[1,1], index: 6, kind: input, shape index: {}]
  %s7 = inlined_call_operand.hbm [shape: f32[3,128], index: 7, kind: output, shape index: {}]
  %s8 = sld [smem:[#allocation0]]
  $region46: #{tpu_custom_call.1} parent=0
    _
  %s10 = ssub.s32 1, %s8
  %s11 = scalar_select 0, %s10, %s8
  %12 = sst [smem:[#allocation3]] %s6
  $region1: #{tpu_custom_call.1} parent=0
    #allocation4 [shape = 'u8[24576]{0}', space=vmem, size = 0x6000, scoped, tag = 'input window, operand 0, single buffered']
    #allocation5 [shape = 's32[1]{0}', space=sflag, size = 0x4, scoped, tag = 'scoped memory for tpu_custom_call.1']
    #allocation6 [shape = 's32[1]{0}', space=sflag, size = 0x4, scoped, tag = 'scoped memory for tpu_custom_call.1']
    #allocation7 [shape = 'u8[1536]{0}', space=vmem, size = 0x800, scoped, tag = 'input window, operand 1, single buffered']
    #allocation8 [shape = 's32[1]{0}', space=sflag, size = 0x4, scoped, tag = 'scoped memory for tpu_custom_call.1']
    #allocation9 [shape = 'u8[2048]{0}', space=vmem, size = 0x800, scoped, tag = 'output window, operand 0, single buffered']
    %13 = vsyncpa [#allocation5], 0
    %14 = vsyncpa [#allocation8], 0
    %15 = vsyncpa [#allocation6], 0
    // Predicated region
    $region2: #{tpu_custom_call.1} parent=1 // pred_check
      _
    $region3: #{tpu_custom_call.1} parent=1 // pred_check_branch
      %17 = sbr.rel (0) target = $region5
    $region4: #{tpu_custom_call.1} parent=1 // pred_region
      %19 = vsyncadd [#allocation5], 0
      %s20 = sshll.u32 %s0, 4
      %s21 = int_to_ptr.hbm [resolvable:$true] %s20
      %s22 = sshll.u32 [#allocation4], 4
      %s23 = int_to_ptr.vmem [resolvable:$true] %s22
      %28 = dma.hbm_to_vmem [thread:$0]  %s21, 768, %s23, [#allocation5], 128, 128, 8
    $region5: #{tpu_custom_call.1} parent=1 // pred_fallthru
      _
    // Predicated region
    $region6: #{tpu_custom_call.1} parent=1 // pred_check
      _
    $region7: #{tpu_custom_call.1} parent=1 // pred_check_branch
      %30 = sbr.rel (0) target = $region9
    $region8: #{tpu_custom_call.1} parent=1 // pred_region
      %32 = vsyncadd [#allocation8], 0
      %s33 = sshll.u32 %s1, 4
      %s34 = int_to_ptr.hbm [resolvable:$true] %s33
      %s35 = sshll.u32 [#allocation7], 4
      %s36 = int_to_ptr.vmem [resolvable:$true] %s35
      %41 = dma.hbm_to_vmem [thread:$0]  %s34, 48, %s36, [#allocation8], 16, 16, 1
    $region9: #{tpu_custom_call.1} parent=1 // pred_fallthru
      _
    // Predicated region
    $region10: #{tpu_custom_call.1} parent=1 // pred_check
      _
    $region11: #{tpu_custom_call.1} parent=1 // pred_check_branch
      %43 = sbr.rel (0) target = $region13
    $region12: #{tpu_custom_call.1} parent=1 // pred_region
      _
    $region13: #{tpu_custom_call.1} parent=1 // pred_fallthru
      _
    // Predicated region
    $region14: #{tpu_custom_call.1} parent=1 // pred_check
      _
    $region15: #{tpu_custom_call.1} parent=1 // pred_check_branch
      %45 = sbr.rel (0) target = $region17
    $region16: #{tpu_custom_call.1} parent=1 // pred_region
      _
    $region17: #{tpu_custom_call.1} parent=1 // pred_fallthru
      _
    // Predicated region
    $region18: #{tpu_custom_call.1} parent=1 // pred_check
      _
    $region19: #{tpu_custom_call.1} parent=1 // pred_check_branch
      %47 = sbr.rel (0) target = $region21
    $region20: #{tpu_custom_call.1} parent=1 // pred_region
      _
    $region21: #{tpu_custom_call.1} parent=1 // pred_fallthru
      _
    // Predicated region
    $region22: #{tpu_custom_call.1} parent=1 // pred_check
      _
    $region23: #{tpu_custom_call.1} parent=1 // pred_check_branch
      %49 = sbr.rel (0) target = $region25
    $region24: #{tpu_custom_call.1} parent=1 // pred_region
      _
    $region25: #{tpu_custom_call.1} parent=1 // pred_fallthru
      _
    // Predicated region
    $region26: #{tpu_custom_call.1} parent=1 // pred_check
      _
    $region27: #{tpu_custom_call.1} parent=1 // pred_check_branch
      %51 = sbr.rel (0) target = $region29
    $region28: #{tpu_custom_call.1} parent=1 // pred_region
      _
    $region29: #{tpu_custom_call.1} parent=1 // pred_fallthru
      _
    // Predicated region
    $region30: #{tpu_custom_call.1} parent=1 // pred_check
      _
    $region31: #{tpu_custom_call.1} parent=1 // pred_check_branch
      %53 = sbr.rel (0) target = $region33
    $region32: #{tpu_custom_call.1} parent=1 // pred_region
      %55 = dma.done [#allocation5], 768
    $region33: #{tpu_custom_call.1} parent=1 // pred_fallthru
      _
    // Predicated region
    $region34: #{tpu_custom_call.1} parent=1 // pred_check
      _
    $region35: #{tpu_custom_call.1} parent=1 // pred_check_branch
      %57 = sbr.rel (0) target = $region37
    $region36: #{tpu_custom_call.1} parent=1 // pred_region
      %59 = dma.done [#allocation8], 48
    $region37: #{tpu_custom_call.1} parent=1 // pred_fallthru
      _
    %v60 = vld [vmem:[%s2] sm:$0xff]
    %v61 = vld [vmem:[%s2 + $0x8] sm:$0xff]
    %v62 = vld [vmem:[%s2 + $0x10] sm:$0xff]
    %v63 = vld [vmem:[%s2 + $0x18] sm:$0xff]
    %v64 = vld [vmem:[%s2 + $0x20] sm:$0xff]
    %v65 = vld [vmem:[%s2 + $0x28] sm:$0xff]
    %v66 = vld [vmem:[%s2 + $0x30] sm:$0xff]
    %v67 = vld [vmem:[%s2 + $0x38] sm:$0xff]
    %v68 = vld [vmem:[%s2 + $0x40] sm:$0xff]
    %v69 = vld [vmem:[%s2 + $0x48] sm:$0xff]
    %v70 = vld [vmem:[%s2 + $0x50] sm:$0xff]
    %v71 = vld [vmem:[%s2 + $0x58] sm:$0xff]
    %v72 = vld [vmem:[%s2 + $0x60] sm:$0xff]
    %v73 = vld [vmem:[%s2 + $0x68] sm:$0xff]
    %v74 = vld [vmem:[%s2 + $0x70] sm:$0xff]
    %v75 = vld [vmem:[%s2 + $0x78] sm:$0xff]
    %v76 = vld [vmem:[%s3] sm:$0x1]
    %v77 = vld [vmem:[#allocation4] sm:$0xff]
    %v78 = vld [vmem:[#allocation4 + $0x8] sm:$0xff]
    %v79 = vld [vmem:[#allocation4 + $0x10] sm:$0xff]
    %v80 = vld [vmem:[#allocation4 + $0x18] sm:$0xff]
    %v81 = vld [vmem:[#allocation4 + $0x20] sm:$0xff]
    %v82 = vld [vmem:[#allocation4 + $0x28] sm:$0xff]
    %v84 = vperm.slane %v76, 0
    %86 = vmatpush.msra.mxu0 %v75
    %87 = vmatpush.msra.mxu0 %v74
    %88 = vmatpush.msra.mxu0 %v73
    %89 = vmatpush.msra.mxu0 %v72
    %90 = vmatpush.msra.mxu0 %v71
    %91 = vmatpush.msra.mxu0 %v70
    %92 = vmatpush.msra.mxu0 %v69
    %93 = vmatpush.msra.mxu0 %v68
    %94 = vmatpush.msra.mxu0 %v67
    %95 = vmatpush.msra.mxu0 %v66
    %96 = vmatpush.msra.mxu0 %v65
    %97 = vmatpush.msra.mxu0 %v64
    %98 = vmatpush.msra.mxu0 %v63
    %99 = vmatpush.msra.mxu0 %v62
    %100 = vmatpush.msra.mxu0 %v61
    %101 = vmatpush.msra.mxu0 %v60
    %102 = vmatmul.f32.gmra.mxu0 %v77
    %v103 = vpop.f32.mrf.mxu0
    %v104 = vadd.f32 %v84, %v103
    %105 = vmatmul.f32.gmra.mxu0 %v78
    %v106 = vpop.f32.mrf.mxu0
    %v107 = vadd.f32 %v84, %v106
    %108 = vmatmul.f32.gmra.mxu0 %v79
    %v109 = vpop.f32.mrf.mxu0
    %v110 = vadd.f32 %v84, %v109
    %111 = vmatmul.f32.gmra.mxu0 %v80
    %v112 = vpop.f32.mrf.mxu0
    %v113 = vadd.f32 %v84, %v112
    %114 = vmatmul.f32.gmra.mxu0 %v81
    %v115 = vpop.f32.mrf.mxu0
    %v116 = vadd.f32 %v84, %v115
    %117 = vmatmul.f32.gmra.mxu0 %v82
    %v118 = vpop.f32.mrf.mxu0
    %v119 = vadd.f32 %v84, %v118
    %120 = vdwg.mxu0
    %v121 = vmax.f32 %v104, 0.0
    %v122 = vmax.f32 %v107, 0.0
    %v123 = vmax.f32 %v110, 0.0
    %v124 = vmax.f32 %v113, 0.0
    %v125 = vmax.f32 %v116, 0.0
    %v126 = vmax.f32 %v119, 0.0
    %v127 = vld [vmem:[%s4] sm:$0xff]
    %v128 = vld [vmem:[%s4 + $0x8] sm:$0xff]
    %v129 = vld [vmem:[%s4 + $0x10] sm:$0xff]
    %v130 = vld [vmem:[%s4 + $0x18] sm:$0xff]
    %v131 = vld [vmem:[%s4 + $0x20] sm:$0xff]
    %v132 = vld [vmem:[%s4 + $0x28] sm:$0xff]
    %v133 = vld [vmem:[%s4 + $0x30] sm:$0xff]
    %v134 = vld [vmem:[%s4 + $0x38] sm:$0xff]
    %v135 = vld [vmem:[%s4 + $0x40] sm:$0xff]
    %v136 = vld [vmem:[%s4 + $0x48] sm:$0xff]
    %v137 = vld [vmem:[%s4 + $0x50] sm:$0xff]
    %v138 = vld [vmem:[%s4 + $0x58] sm:$0xff]
    %v139 = vld [vmem:[%s4 + $0x60] sm:$0xff]
    %v140 = vld [vmem:[%s4 + $0x68] sm:$0xff]
    %v141 = vld [vmem:[%s4 + $0x70] sm:$0xff]
    %v142 = vld [vmem:[%s4 + $0x78] sm:$0xff]
    %143 = vmatpush.msra.mxu0 %v142
    %144 = vmatpush.msra.mxu0 %v141
    %145 = vmatpush.msra.mxu0 %v140
    %146 = vmatpush.msra.mxu0 %v139
    %147 = vmatpush.msra.mxu0 %v138
    %148 = vmatpush.msra.mxu0 %v137
    %149 = vmatpush.msra.mxu0 %v136
    %150 = vmatpush.msra.mxu0 %v135
    %151 = vmatpush.msra.mxu0 %v134
    %152 = vmatpush.msra.mxu0 %v133
    %153 = vmatpush.msra.mxu0 %v132
    %154 = vmatpush.msra.mxu0 %v131
    %155 = vmatpush.msra.mxu0 %v130
    %156 = vmatpush.msra.mxu0 %v129
    %157 = vmatpush.msra.mxu0 %v128
    %158 = vmatpush.msra.mxu0 %v127
    %159 = vmatmul.f32.gmra.mxu0 %v121
    %v160 = vpop.f32.mrf.mxu0
    %v161 = vadd.f32 0.0, %v160
    %162 = vmatmul.f32.gmra.mxu0 %v122
    %v163 = vpop.f32.mrf.mxu0
    %v164 = vadd.f32 0.0, %v163
    %165 = vmatmul.f32.gmra.mxu0 %v123
    %v166 = vpop.f32.mrf.mxu0
    %v167 = vadd.f32 0.0, %v166
    %168 = vmatmul.f32.gmra.mxu0 %v124
    %v169 = vpop.f32.mrf.mxu0
    %v170 = vadd.f32 0.0, %v169
    %171 = vmatmul.f32.gmra.mxu0 %v125
    %v172 = vpop.f32.mrf.mxu0
    %v173 = vadd.f32 0.0, %v172
    %174 = vmatmul.f32.gmra.mxu0 %v126
    %v175 = vpop.f32.mrf.mxu0
    %v176 = vadd.f32 0.0, %v175
    %177 = vdwg.mxu0
    %184 = vset.pattern.permute.xlu0 0
    %185 = vperm.xlu0 %184, %v161
    %v186 = vpop.permute.xlu0 %185
    %187 = vset.pattern.permute.xlu0 0
    %188 = vperm.xlu0 %187, %v164
    %v189 = vpop.permute.xlu0 %188
    %190 = vset.pattern.permute.xlu0 0
    %191 = vperm.xlu0 %190, %v167
    %v192 = vpop.permute.xlu0 %191
    %193 = vset.pattern.permute.xlu0 0
    %194 = vperm.xlu0 %193, %v170
    %v195 = vpop.permute.xlu0 %194
    %196 = vset.pattern.permute.xlu0 0
    %197 = vperm.xlu0 %196, %v173
    %v198 = vpop.permute.xlu0 %197
    %199 = vset.pattern.permute.xlu0 0
    %200 = vperm.xlu0 %199, %v176
    %v201 = vpop.permute.xlu0 %200
    %v202 = vlaneseq
    %v203 = vand.u32 %v202, 127
    %v204 = vperm.slane %v186, %v203
    %v205 = vadd.s32 %v203, 4294967288
    %v206 = vperm.slane %v189, %v205
    %vm207 = vcmask 130112
    %v208 = vsel %vm207, %v206, %v204
    %v209 = vperm.slane %v192, %v203
    %v210 = vperm.slane %v195, %v205
    %v211 = vsel %vm207, %v210, %v209
    %v212 = vperm.slane %v198, %v203
    %v213 = vperm.slane %v201, %v205
    %v214 = vsel %vm207, %v213, %v212
    %vm218 = vcmask 122880
    %219 = vst.msk [vmem:[#allocation2] sm:$0x1] %vm218, %v208
    %220 = vst.msk [vmem:[#allocation2 + $0x1] sm:$0x1] %vm218, %v211
    %221 = vst.msk [vmem:[#allocation2 + $0x2] sm:$0x1] %vm218, %v214
    %v222 = vld [vmem:[#allocation7] sm:$0x1]
    %v223 = vld [vmem:[#allocation7 + $0x1] sm:$0x1]
    %v224 = vld [vmem:[#allocation7 + $0x2] sm:$0x1]
    %v225 = vld [vmem:[#allocation2] sm:$0x1]
    %v226 = vld [vmem:[#allocation2 + $0x1] sm:$0x1]
    %v227 = vld [vmem:[#allocation2 + $0x2] sm:$0x1]
    %s228 = sld [smem:[#allocation3]]
    %v229 = vstv %s228
    %v230 = vadd.f32 %v225, %v229
    %v231 = vadd.f32 %v226, %v229
    %v232 = vadd.f32 %v227, %v229
    %vm233 = vcmp.gt.f32.partialorder %v222, 0.0
    %vm234 = vcmp.gt.f32.partialorder %v223, 0.0
    %vm235 = vcmp.gt.f32.partialorder %v224, 0.0
    %v236 = vsel %vm233, %v230, -1e+30
    %v237 = vsel %vm234, %v231, -1e+30
    %v238 = vsel %vm235, %v232, -1e+30
    %v239 = vsel %vm218, %v236, -inf
    %240 = vmax.xlane.f32.xlu0 %v239
    %v241 = vpop.xlane.xlu0 %240
    %v242 = vsel %vm218, %v237, -inf
    %243 = vmax.xlane.f32.xlu0 %v242
    %v244 = vpop.xlane.xlu0 %243
    %v245 = vsel %vm218, %v238, -inf
    %246 = vmax.xlane.f32.xlu0 %v245
    %v247 = vpop.xlane.xlu0 %246
    %v248 = vsub.f32 %v236, %v241
    %v249 = vsub.f32 %v237, %v244
    %v250 = vsub.f32 %v238, %v247
    %v251 = vmul.f32 %v248, 1.442695
    %v252 = vpow.pop %v251
    %v253 = vmul.f32 %v249, 1.442695
    %v254 = vpow.pop %v253
    %v255 = vmul.f32 %v250, 1.442695
    %v256 = vpow.pop %v255
    %v257 = vmul.f32 %v252, %v222
    %v258 = vmul.f32 %v254, %v223
    %v259 = vmul.f32 %v256, %v224
    %v260 = vsel %vm218, %v257, 0.0
    %261 = vadd.xlane.f32.xlu0 %v260
    %v262 = vpop.xlane.xlu0 %261
    %v263 = vsel %vm218, %v258, 0.0
    %264 = vadd.xlane.f32.xlu0 %v263
    %v265 = vpop.xlane.xlu0 %264
    %v266 = vsel %vm218, %v259, 0.0
    %267 = vadd.xlane.f32.xlu0 %v266
    %v268 = vpop.xlane.xlu0 %267
    %v269 = vadd.f32 %v262, 1e-13
    %v270 = vadd.f32 %v265, 1e-13
    %v271 = vadd.f32 %v268, 1e-13
    %v272 = vrcp.pop %v269
    %v273 = vmul.f32 %v269, %v272
    %v274 = vsub.f32 1.0, %v273
    %v275 = vmul.f32 %v272, %v274
    %v276 = vadd.f32 %v272, %v275
    %vm277 = vweird.f32 %v269
    %vm278 = vweird.f32 %v272
    %vm279 = vmor %vm277, %vm278
    %v280 = vsel %vm279, %v272, %v276
    %v281 = vand.u32 2147483647, %v269
    %vm282 = vcmp.eq.f32.partialorder %v281, 8.507059e+37
    %v283 = vand.u32 %v269, 2147483648
    %v284 = vor.u32 1.1754944e-38, %v283
    %v285 = vsel %vm282, %v284, %v280
    %v286 = vmul.f32 1.0, %v285
    %v287 = vrcp.pop %v270
    %v288 = vmul.f32 %v270, %v287
    %v289 = vsub.f32 1.0, %v288
    %v290 = vmul.f32 %v287, %v289
    %v291 = vadd.f32 %v287, %v290
    %vm292 = vweird.f32 %v270
    %vm293 = vweird.f32 %v287
    %vm294 = vmor %vm292, %vm293
    %v295 = vsel %vm294, %v287, %v291
    %v296 = vand.u32 2147483647, %v270
    %vm297 = vcmp.eq.f32.partialorder %v296, 8.507059e+37
    %v298 = vand.u32 %v270, 2147483648
    %v299 = vor.u32 1.1754944e-38, %v298
    %v300 = vsel %vm297, %v299, %v295
    %v301 = vmul.f32 1.0, %v300
    %v302 = vrcp.pop %v271
    %v303 = vmul.f32 %v271, %v302
    %v304 = vsub.f32 1.0, %v303
    %v305 = vmul.f32 %v302, %v304
    %v306 = vadd.f32 %v302, %v305
    %vm307 = vweird.f32 %v271
    %vm308 = vweird.f32 %v302
    %vm309 = vmor %vm307, %vm308
    %v310 = vsel %vm309, %v302, %v306
    %v311 = vand.u32 2147483647, %v271
    %vm312 = vcmp.eq.f32.partialorder %v311, 8.507059e+37
    %v313 = vand.u32 %v271, 2147483648
    %v314 = vor.u32 1.1754944e-38, %v313
    %v315 = vsel %vm312, %v314, %v310
    %v316 = vmul.f32 1.0, %v315
    %v317 = vmul.f32 %v257, %v286
    %v318 = vmul.f32 %v258, %v301
    %v319 = vmul.f32 %v259, %v316
    %v320 = vld [vmem:[#allocation4] sm:$0xff]
    %v321 = vld [vmem:[#allocation4 + $0x8] sm:$0xff]
    %v322 = vld [vmem:[#allocation4 + $0x10] sm:$0xff]
    %v323 = vld [vmem:[#allocation4 + $0x18] sm:$0xff]
    %v324 = vld [vmem:[#allocation4 + $0x20] sm:$0xff]
    %v325 = vld [vmem:[#allocation4 + $0x28] sm:$0xff]
    %vm326 = vcmask 130048
    %v328 = vsel %vm326, %v317, 0
    %330 = vmatpush.msra.mxu0 0.0
    %331 = vmatpush.msra.mxu0 0.0
    %332 = vmatpush.msra.mxu0 0.0
    %333 = vmatpush.msra.mxu0 0.0
    %334 = vmatpush.msra.mxu0 0.0
    %335 = vmatpush.msra.mxu0 0.0
    %336 = vmatpush.msra.mxu0 0.0
    %337 = vmatpush.msra.mxu0 0.0
    %338 = vmatpush.msra.mxu0 0.0
    %339 = vmatpush.msra.mxu0 0.0
    %340 = vmatpush.msra.mxu0 0.0
    %341 = vmatpush.msra.mxu0 0.0
    %342 = vmatpush.msra.mxu0 0.0
    %343 = vmatpush.msra.mxu0 0.0
    %344 = vmatpush.msra.mxu0 %v321
    %345 = vmatpush.msra.mxu0 %v320
    %346 = vmatmul.f32.gmra.mxu0 %v328
    %v347 = vpop.f32.mrf.mxu0
    %v348 = vadd.f32 0.0, %v347
    %349 = vdwg.mxu0
    %v351 = vsel %vm326, %v318, 0
    %353 = vmatpush.msra.mxu0 0.0
    %354 = vmatpush.msra.mxu0 0.0
    %355 = vmatpush.msra.mxu0 0.0
    %356 = vmatpush.msra.mxu0 0.0
    %357 = vmatpush.msra.mxu0 0.0
    %358 = vmatpush.msra.mxu0 0.0
    %359 = vmatpush.msra.mxu0 0.0
    %360 = vmatpush.msra.mxu0 0.0
    %361 = vmatpush.msra.mxu0 0.0
    %362 = vmatpush.msra.mxu0 0.0
    %363 = vmatpush.msra.mxu0 0.0
    %364 = vmatpush.msra.mxu0 0.0
    %365 = vmatpush.msra.mxu0 0.0
    %366 = vmatpush.msra.mxu0 0.0
    %367 = vmatpush.msra.mxu0 %v323
    %368 = vmatpush.msra.mxu0 %v322
    %369 = vmatmul.f32.gmra.mxu0 %v351
    %v370 = vpop.f32.mrf.mxu0
    %v371 = vadd.f32 0.0, %v370
    %372 = vdwg.mxu0
    %v374 = vsel %vm326, %v319, 0
    %376 = vmatpush.msra.mxu0 0.0
    %377 = vmatpush.msra.mxu0 0.0
    %378 = vmatpush.msra.mxu0 0.0
    %379 = vmatpush.msra.mxu0 0.0
    %380 = vmatpush.msra.mxu0 0.0
    %381 = vmatpush.msra.mxu0 0.0
    %382 = vmatpush.msra.mxu0 0.0
    %383 = vmatpush.msra.mxu0 0.0
    %384 = vmatpush.msra.mxu0 0.0
    %385 = vmatpush.msra.mxu0 0.0
    %386 = vmatpush.msra.mxu0 0.0
    %387 = vmatpush.msra.mxu0 0.0
    %388 = vmatpush.msra.mxu0 0.0
    %389 = vmatpush.msra.mxu0 0.0
    %390 = vmatpush.msra.mxu0 %v325
    %391 = vmatpush.msra.mxu0 %v324
    %392 = vmatmul.f32.gmra.mxu0 %v374
    %v393 = vpop.f32.mrf.mxu0
    %v394 = vadd.f32 0.0, %v393
    %395 = vdwg.mxu0
    %v399 = vrot.slane %v371, 7
    %vm400 = vcmask 1041409
    %v401 = vsel %vm400, %v399, %v348
    %v402 = vrot.slane %v394, 6
    %vm403 = vcmask 1042434
    %v404 = vsel %vm403, %v402, %v401
    %406 = vst [vmem:[#allocation9] sm:$0x7] %v404
    // Predicated region
    $region38: #{tpu_custom_call.1} parent=1 // pred_check
      _
    $region39: #{tpu_custom_call.1} parent=1 // pred_check_branch
      %408 = sbr.rel (0) target = $region41
    $region40: #{tpu_custom_call.1} parent=1 // pred_region
      %410 = vsyncadd [#allocation6], 0
      %s412 = sshll.u32 [#allocation9], 4
      %s413 = int_to_ptr.vmem [resolvable:$true] %s412
      %s414 = sshll.u32 %s7, 4
      %s415 = int_to_ptr.hbm [resolvable:$true] %s414
      %417 = dma.vmem_to_hbm [thread:$0]  %s413, 64, %s415, [#allocation6]
    $region41: #{tpu_custom_call.1} parent=1 // pred_fallthru
      _
    // Predicated region
    $region42: #{tpu_custom_call.1} parent=1 // pred_check
      _
    $region43: #{tpu_custom_call.1} parent=1 // pred_check_branch
      %419 = sbr.rel (0) target = $region45
    $region44: #{tpu_custom_call.1} parent=1 // pred_region
      %421 = dma.done [#allocation6], 64
    $region45: #{tpu_custom_call.1} parent=1 // pred_fallthru
      _
    %422 = vsyncpa [#allocation5], 1
    %423 = vsyncpa [#allocation8], 1
    %424 = vsyncpa [#allocation6], 1

// kernel: tpu_custom_call.1
$region0: #{tpu_custom_call.1}
  #allocation0 [shape = 'u32[]', space=smem, size = 0x4, offset = 0x4, fixed_abs, tag = 'smem constant byte address 0x4 - core index']
  #allocation1 [shape = 'u32[72,128]{1,0:T(1,128)}', space=vmem, size = 0x9000, scoped, tag = 'internal scratch']
  #allocation2 [shape = 'f32[3,1,16]{2,1,0:T(1,128)}', space=vmem, size = 0x600, scoped, tag = 'scratch operand']
  #allocation3 [shape = 'f32[1,1]{1,0:T(1,128)S(6)}', space=smem, size = 0x200, scoped, tag = 'scoped memory for tpu_custom_call.1']
  %s0 = inlined_call_operand.hbm [shape: f32[3,16,128], index: 0, kind: input, shape index: {}]
  %s1 = inlined_call_operand.hbm [shape: f32[3,1,16], index: 1, kind: input, shape index: {}]
  %s2 = inlined_call_operand.vmem [shape: f32[128,128], index: 2, kind: input, shape index: {}]
  %s3 = inlined_call_operand.vmem [shape: f32[1,128], index: 3, kind: input, shape index: {}]
  %s4 = inlined_call_operand.vmem [shape: f32[128,1], index: 4, kind: input, shape index: {}]
  %s5 = inlined_call_operand.vmem [shape: f32[1,128], index: 5, kind: input, shape index: {}]
  %s6 = inlined_call_operand.<no memory space> [shape: f32[1,1], index: 6, kind: input, shape index: {}]
  %s7 = inlined_call_operand.hbm [shape: f32[3,1,128], index: 7, kind: output, shape index: {}]
  %s8 = sld [smem:[#allocation0]]
  $region46: #{tpu_custom_call.1} parent=0
    _
  %s10 = ssub.s32 1, %s8
  %s11 = scalar_select 0, %s10, %s8
  %12 = sst [smem:[#allocation3]] %s6
  $region1: #{tpu_custom_call.1} parent=0
    #allocation4 [shape = 'u8[24576]{0}', space=vmem, size = 0x6000, scoped, tag = 'input window, operand 0, single buffered']
    #allocation5 [shape = 's32[1]{0}', space=sflag, size = 0x4, scoped, tag = 'scoped memory for tpu_custom_call.1']
    #allocation6 [shape = 's32[1]{0}', space=sflag, size = 0x4, scoped, tag = 'scoped memory for tpu_custom_call.1']
    #allocation7 [shape = 'u8[1536]{0}', space=vmem, size = 0x800, scoped, tag = 'input window, operand 1, single buffered']
    #allocation8 [shape = 's32[1]{0}', space=sflag, size = 0x4, scoped, tag = 'scoped memory for tpu_custom_call.1']
    #allocation9 [shape = 'u8[1536]{0}', space=vmem, size = 0x800, scoped, tag = 'output window, operand 0, single buffered']
    %13 = vsyncpa [#allocation5], 0
    %14 = vsyncpa [#allocation8], 0
    %15 = vsyncpa [#allocation6], 0
    // Predicated region
    $region2: #{tpu_custom_call.1} parent=1 // pred_check
      _
    $region3: #{tpu_custom_call.1} parent=1 // pred_check_branch
      %17 = sbr.rel (0) target = $region5
    $region4: #{tpu_custom_call.1} parent=1 // pred_region
      %19 = vsyncadd [#allocation5], 0
      %s20 = sshll.u32 %s0, 4
      %s21 = int_to_ptr.hbm [resolvable:$true] %s20
      %s22 = sshll.u32 [#allocation4], 4
      %s23 = int_to_ptr.vmem [resolvable:$true] %s22
      %28 = dma.hbm_to_vmem [thread:$0]  %s21, 768, %s23, [#allocation5], 128, 128, 8
    $region5: #{tpu_custom_call.1} parent=1 // pred_fallthru
      _
    // Predicated region
    $region6: #{tpu_custom_call.1} parent=1 // pred_check
      _
    $region7: #{tpu_custom_call.1} parent=1 // pred_check_branch
      %30 = sbr.rel (0) target = $region9
    $region8: #{tpu_custom_call.1} parent=1 // pred_region
      %32 = vsyncadd [#allocation8], 0
      %s33 = sshll.u32 %s1, 4
      %s34 = int_to_ptr.hbm [resolvable:$true] %s33
      %s35 = sshll.u32 [#allocation7], 4
      %s36 = int_to_ptr.vmem [resolvable:$true] %s35
      %41 = dma.hbm_to_vmem [thread:$0]  %s34, 48, %s36, [#allocation8], 16, 16, 1
    $region9: #{tpu_custom_call.1} parent=1 // pred_fallthru
      _
    // Predicated region
    $region10: #{tpu_custom_call.1} parent=1 // pred_check
      _
    $region11: #{tpu_custom_call.1} parent=1 // pred_check_branch
      %43 = sbr.rel (0) target = $region13
    $region12: #{tpu_custom_call.1} parent=1 // pred_region
      _
    $region13: #{tpu_custom_call.1} parent=1 // pred_fallthru
      _
    // Predicated region
    $region14: #{tpu_custom_call.1} parent=1 // pred_check
      _
    $region15: #{tpu_custom_call.1} parent=1 // pred_check_branch
      %45 = sbr.rel (0) target = $region17
    $region16: #{tpu_custom_call.1} parent=1 // pred_region
      _
    $region17: #{tpu_custom_call.1} parent=1 // pred_fallthru
      _
    // Predicated region
    $region18: #{tpu_custom_call.1} parent=1 // pred_check
      _
    $region19: #{tpu_custom_call.1} parent=1 // pred_check_branch
      %47 = sbr.rel (0) target = $region21
    $region20: #{tpu_custom_call.1} parent=1 // pred_region
      _
    $region21: #{tpu_custom_call.1} parent=1 // pred_fallthru
      _
    // Predicated region
    $region22: #{tpu_custom_call.1} parent=1 // pred_check
      _
    $region23: #{tpu_custom_call.1} parent=1 // pred_check_branch
      %49 = sbr.rel (0) target = $region25
    $region24: #{tpu_custom_call.1} parent=1 // pred_region
      _
    $region25: #{tpu_custom_call.1} parent=1 // pred_fallthru
      _
    // Predicated region
    $region26: #{tpu_custom_call.1} parent=1 // pred_check
      _
    $region27: #{tpu_custom_call.1} parent=1 // pred_check_branch
      %51 = sbr.rel (0) target = $region29
    $region28: #{tpu_custom_call.1} parent=1 // pred_region
      _
    $region29: #{tpu_custom_call.1} parent=1 // pred_fallthru
      _
    // Predicated region
    $region30: #{tpu_custom_call.1} parent=1 // pred_check
      _
    $region31: #{tpu_custom_call.1} parent=1 // pred_check_branch
      %53 = sbr.rel (0) target = $region33
    $region32: #{tpu_custom_call.1} parent=1 // pred_region
      %55 = dma.done [#allocation5], 768
    $region33: #{tpu_custom_call.1} parent=1 // pred_fallthru
      _
    // Predicated region
    $region34: #{tpu_custom_call.1} parent=1 // pred_check
      _
    $region35: #{tpu_custom_call.1} parent=1 // pred_check_branch
      %57 = sbr.rel (0) target = $region37
    $region36: #{tpu_custom_call.1} parent=1 // pred_region
      %59 = dma.done [#allocation8], 48
    $region37: #{tpu_custom_call.1} parent=1 // pred_fallthru
      _
    %v60 = vld [vmem:[%s2] sm:$0xff]
    %v61 = vld [vmem:[%s2 + $0x8] sm:$0xff]
    %v62 = vld [vmem:[%s2 + $0x10] sm:$0xff]
    %v63 = vld [vmem:[%s2 + $0x18] sm:$0xff]
    %v64 = vld [vmem:[%s2 + $0x20] sm:$0xff]
    %v65 = vld [vmem:[%s2 + $0x28] sm:$0xff]
    %v66 = vld [vmem:[%s2 + $0x30] sm:$0xff]
    %v67 = vld [vmem:[%s2 + $0x38] sm:$0xff]
    %v68 = vld [vmem:[%s2 + $0x40] sm:$0xff]
    %v69 = vld [vmem:[%s2 + $0x48] sm:$0xff]
    %v70 = vld [vmem:[%s2 + $0x50] sm:$0xff]
    %v71 = vld [vmem:[%s2 + $0x58] sm:$0xff]
    %v72 = vld [vmem:[%s2 + $0x60] sm:$0xff]
    %v73 = vld [vmem:[%s2 + $0x68] sm:$0xff]
    %v74 = vld [vmem:[%s2 + $0x70] sm:$0xff]
    %v75 = vld [vmem:[%s2 + $0x78] sm:$0xff]
    %v76 = vld [vmem:[%s3] sm:$0x1]
    %v77 = vld [vmem:[#allocation4] sm:$0xff]
    %v78 = vld [vmem:[#allocation4 + $0x8] sm:$0xff]
    %v79 = vld [vmem:[#allocation4 + $0x10] sm:$0xff]
    %v80 = vld [vmem:[#allocation4 + $0x18] sm:$0xff]
    %v81 = vld [vmem:[#allocation4 + $0x20] sm:$0xff]
    %v82 = vld [vmem:[#allocation4 + $0x28] sm:$0xff]
    %v84 = vperm.slane %v76, 0
    %86 = vmatpush.msra.mxu0 %v75
    %87 = vmatpush.msra.mxu0 %v74
    %88 = vmatpush.msra.mxu0 %v73
    %89 = vmatpush.msra.mxu0 %v72
    %90 = vmatpush.msra.mxu0 %v71
    %91 = vmatpush.msra.mxu0 %v70
    %92 = vmatpush.msra.mxu0 %v69
    %93 = vmatpush.msra.mxu0 %v68
    %94 = vmatpush.msra.mxu0 %v67
    %95 = vmatpush.msra.mxu0 %v66
    %96 = vmatpush.msra.mxu0 %v65
    %97 = vmatpush.msra.mxu0 %v64
    %98 = vmatpush.msra.mxu0 %v63
    %99 = vmatpush.msra.mxu0 %v62
    %100 = vmatpush.msra.mxu0 %v61
    %101 = vmatpush.msra.mxu0 %v60
    %102 = vmatmul.f32.gmra.mxu0 %v77
    %v103 = vpop.f32.mrf.mxu0
    %v104 = vadd.f32 %v84, %v103
    %105 = vmatmul.f32.gmra.mxu0 %v78
    %v106 = vpop.f32.mrf.mxu0
    %v107 = vadd.f32 %v84, %v106
    %108 = vmatmul.f32.gmra.mxu0 %v79
    %v109 = vpop.f32.mrf.mxu0
    %v110 = vadd.f32 %v84, %v109
    %111 = vmatmul.f32.gmra.mxu0 %v80
    %v112 = vpop.f32.mrf.mxu0
    %v113 = vadd.f32 %v84, %v112
    %114 = vmatmul.f32.gmra.mxu0 %v81
    %v115 = vpop.f32.mrf.mxu0
    %v116 = vadd.f32 %v84, %v115
    %117 = vmatmul.f32.gmra.mxu0 %v82
    %v118 = vpop.f32.mrf.mxu0
    %v119 = vadd.f32 %v84, %v118
    %120 = vdwg.mxu0
    %v121 = vmax.f32 %v104, 0.0
    %v122 = vmax.f32 %v107, 0.0
    %v123 = vmax.f32 %v110, 0.0
    %v124 = vmax.f32 %v113, 0.0
    %v125 = vmax.f32 %v116, 0.0
    %v126 = vmax.f32 %v119, 0.0
    %v127 = vld [vmem:[%s5] sm:$0x1]
    %128 = vmatpush.xpose.msra.mxu0 0.0
    %129 = vmatpush.xpose.msra.mxu0 0.0
    %130 = vmatpush.xpose.msra.mxu0 0.0
    %131 = vmatpush.xpose.msra.mxu0 0.0
    %132 = vmatpush.xpose.msra.mxu0 0.0
    %133 = vmatpush.xpose.msra.mxu0 0.0
    %134 = vmatpush.xpose.msra.mxu0 0.0
    %135 = vmatpush.xpose.msra.mxu0 0.0
    %136 = vmatpush.xpose.msra.mxu0 0.0
    %137 = vmatpush.xpose.msra.mxu0 0.0
    %138 = vmatpush.xpose.msra.mxu0 0.0
    %139 = vmatpush.xpose.msra.mxu0 0.0
    %140 = vmatpush.xpose.msra.mxu0 0.0
    %141 = vmatpush.xpose.msra.mxu0 0.0
    %142 = vmatpush.xpose.msra.mxu0 %v122
    %143 = vmatpush.xpose.msra.mxu0 %v121
    %144 = vmatmul.f32.gmra.mxu0 %v127
    %v145 = vpop.f32.mrf.mxu0
    %v146 = vadd.f32 0.0, %v145
    %147 = vdwg.mxu0
    %148 = vmatpush.xpose.msra.mxu0 0.0
    %149 = vmatpush.xpose.msra.mxu0 0.0
    %150 = vmatpush.xpose.msra.mxu0 0.0
    %151 = vmatpush.xpose.msra.mxu0 0.0
    %152 = vmatpush.xpose.msra.mxu0 0.0
    %153 = vmatpush.xpose.msra.mxu0 0.0
    %154 = vmatpush.xpose.msra.mxu0 0.0
    %155 = vmatpush.xpose.msra.mxu0 0.0
    %156 = vmatpush.xpose.msra.mxu0 0.0
    %157 = vmatpush.xpose.msra.mxu0 0.0
    %158 = vmatpush.xpose.msra.mxu0 0.0
    %159 = vmatpush.xpose.msra.mxu0 0.0
    %160 = vmatpush.xpose.msra.mxu0 0.0
    %161 = vmatpush.xpose.msra.mxu0 0.0
    %162 = vmatpush.xpose.msra.mxu0 %v124
    %163 = vmatpush.xpose.msra.mxu0 %v123
    %164 = vmatmul.f32.gmra.mxu0 %v127
    %v165 = vpop.f32.mrf.mxu0
    %v166 = vadd.f32 0.0, %v165
    %167 = vdwg.mxu0
    %168 = vmatpush.xpose.msra.mxu0 0.0
    %169 = vmatpush.xpose.msra.mxu0 0.0
    %170 = vmatpush.xpose.msra.mxu0 0.0
    %171 = vmatpush.xpose.msra.mxu0 0.0
    %172 = vmatpush.xpose.msra.mxu0 0.0
    %173 = vmatpush.xpose.msra.mxu0 0.0
    %174 = vmatpush.xpose.msra.mxu0 0.0
    %175 = vmatpush.xpose.msra.mxu0 0.0
    %176 = vmatpush.xpose.msra.mxu0 0.0
    %177 = vmatpush.xpose.msra.mxu0 0.0
    %178 = vmatpush.xpose.msra.mxu0 0.0
    %179 = vmatpush.xpose.msra.mxu0 0.0
    %180 = vmatpush.xpose.msra.mxu0 0.0
    %181 = vmatpush.xpose.msra.mxu0 0.0
    %182 = vmatpush.xpose.msra.mxu0 %v126
    %183 = vmatpush.xpose.msra.mxu0 %v125
    %184 = vmatmul.f32.gmra.mxu0 %v127
    %v185 = vpop.f32.mrf.mxu0
    %v186 = vadd.f32 0.0, %v185
    %187 = vdwg.mxu0
    %vm188 = vcmask 122880
    %189 = vst.msk [vmem:[#allocation2] sm:$0x1] %vm188, %v146
    %190 = vst.msk [vmem:[#allocation2 + $0x1] sm:$0x1] %vm188, %v166
    %191 = vst.msk [vmem:[#allocation2 + $0x2] sm:$0x1] %vm188, %v186
    %v192 = vld [vmem:[#allocation7] sm:$0x1]
    %v193 = vld [vmem:[#allocation7 + $0x1] sm:$0x1]
    %v194 = vld [vmem:[#allocation7 + $0x2] sm:$0x1]
    %v195 = vld [vmem:[#allocation2] sm:$0x1]
    %v196 = vld [vmem:[#allocation2 + $0x1] sm:$0x1]
    %v197 = vld [vmem:[#allocation2 + $0x2] sm:$0x1]
    %s198 = sld [smem:[#allocation3]]
    %v199 = vstv %s198
    %v200 = vadd.f32 %v195, %v199
    %v201 = vadd.f32 %v196, %v199
    %v202 = vadd.f32 %v197, %v199
    %vm203 = vcmp.gt.f32.partialorder %v192, 0.0
    %vm204 = vcmp.gt.f32.partialorder %v193, 0.0
    %vm205 = vcmp.gt.f32.partialorder %v194, 0.0
    %v206 = vsel %vm203, %v200, -1e+30
    %v207 = vsel %vm204, %v201, -1e+30
    %v208 = vsel %vm205, %v202, -1e+30
    %v209 = vsel %vm188, %v206, -inf
    %210 = vmax.xlane.f32.xlu0 %v209
    %v211 = vpop.xlane.xlu0 %210
    %v212 = vsel %vm188, %v207, -inf
    %213 = vmax.xlane.f32.xlu0 %v212
    %v214 = vpop.xlane.xlu0 %213
    %v215 = vsel %vm188, %v208, -inf
    %216 = vmax.xlane.f32.xlu0 %v215
    %v217 = vpop.xlane.xlu0 %216
    %v218 = vsub.f32 %v206, %v211
    %v219 = vsub.f32 %v207, %v214
    %v220 = vsub.f32 %v208, %v217
    %v221 = vmul.f32 %v218, 1.442695
    %v222 = vpow.pop %v221
    %v223 = vmul.f32 %v219, 1.442695
    %v224 = vpow.pop %v223
    %v225 = vmul.f32 %v220, 1.442695
    %v226 = vpow.pop %v225
    %v227 = vmul.f32 %v222, %v192
    %v228 = vmul.f32 %v224, %v193
    %v229 = vmul.f32 %v226, %v194
    %v230 = vsel %vm188, %v227, 0.0
    %231 = vadd.xlane.f32.xlu0 %v230
    %v232 = vpop.xlane.xlu0 %231
    %v233 = vsel %vm188, %v228, 0.0
    %234 = vadd.xlane.f32.xlu0 %v233
    %v235 = vpop.xlane.xlu0 %234
    %v236 = vsel %vm188, %v229, 0.0
    %237 = vadd.xlane.f32.xlu0 %v236
    %v238 = vpop.xlane.xlu0 %237
    %v239 = vadd.f32 %v232, 1e-13
    %v240 = vadd.f32 %v235, 1e-13
    %v241 = vadd.f32 %v238, 1e-13
    %v242 = vrcp.pop %v239
    %v243 = vmul.f32 %v239, %v242
    %v244 = vsub.f32 1.0, %v243
    %v245 = vmul.f32 %v242, %v244
    %v246 = vadd.f32 %v242, %v245
    %vm247 = vweird.f32 %v239
    %vm248 = vweird.f32 %v242
    %vm249 = vmor %vm247, %vm248
    %v250 = vsel %vm249, %v242, %v246
    %v251 = vand.u32 2147483647, %v239
    %vm252 = vcmp.eq.f32.partialorder %v251, 8.507059e+37
    %v253 = vand.u32 %v239, 2147483648
    %v254 = vor.u32 1.1754944e-38, %v253
    %v255 = vsel %vm252, %v254, %v250
    %v256 = vmul.f32 1.0, %v255
    %v257 = vrcp.pop %v240
    %v258 = vmul.f32 %v240, %v257
    %v259 = vsub.f32 1.0, %v258
    %v260 = vmul.f32 %v257, %v259
    %v261 = vadd.f32 %v257, %v260
    %vm262 = vweird.f32 %v240
    %vm263 = vweird.f32 %v257
    %vm264 = vmor %vm262, %vm263
    %v265 = vsel %vm264, %v257, %v261
    %v266 = vand.u32 2147483647, %v240
    %vm267 = vcmp.eq.f32.partialorder %v266, 8.507059e+37
    %v268 = vand.u32 %v240, 2147483648
    %v269 = vor.u32 1.1754944e-38, %v268
    %v270 = vsel %vm267, %v269, %v265
    %v271 = vmul.f32 1.0, %v270
    %v272 = vrcp.pop %v241
    %v273 = vmul.f32 %v241, %v272
    %v274 = vsub.f32 1.0, %v273
    %v275 = vmul.f32 %v272, %v274
    %v276 = vadd.f32 %v272, %v275
    %vm277 = vweird.f32 %v241
    %vm278 = vweird.f32 %v272
    %vm279 = vmor %vm277, %vm278
    %v280 = vsel %vm279, %v272, %v276
    %v281 = vand.u32 2147483647, %v241
    %vm282 = vcmp.eq.f32.partialorder %v281, 8.507059e+37
    %v283 = vand.u32 %v241, 2147483648
    %v284 = vor.u32 1.1754944e-38, %v283
    %v285 = vsel %vm282, %v284, %v280
    %v286 = vmul.f32 1.0, %v285
    %v287 = vmul.f32 %v227, %v256
    %v288 = vmul.f32 %v228, %v271
    %v289 = vmul.f32 %v229, %v286
    %v290 = vld [vmem:[#allocation4] sm:$0xff]
    %v291 = vld [vmem:[#allocation4 + $0x8] sm:$0xff]
    %v292 = vld [vmem:[#allocation4 + $0x10] sm:$0xff]
    %v293 = vld [vmem:[#allocation4 + $0x18] sm:$0xff]
    %v294 = vld [vmem:[#allocation4 + $0x20] sm:$0xff]
    %v295 = vld [vmem:[#allocation4 + $0x28] sm:$0xff]
    %vm296 = vcmask 130048
    %v298 = vsel %vm296, %v287, 0
    %300 = vmatpush.msra.mxu0 0.0
    %301 = vmatpush.msra.mxu0 0.0
    %302 = vmatpush.msra.mxu0 0.0
    %303 = vmatpush.msra.mxu0 0.0
    %304 = vmatpush.msra.mxu0 0.0
    %305 = vmatpush.msra.mxu0 0.0
    %306 = vmatpush.msra.mxu0 0.0
    %307 = vmatpush.msra.mxu0 0.0
    %308 = vmatpush.msra.mxu0 0.0
    %309 = vmatpush.msra.mxu0 0.0
    %310 = vmatpush.msra.mxu0 0.0
    %311 = vmatpush.msra.mxu0 0.0
    %312 = vmatpush.msra.mxu0 0.0
    %313 = vmatpush.msra.mxu0 0.0
    %314 = vmatpush.msra.mxu0 %v291
    %315 = vmatpush.msra.mxu0 %v290
    %316 = vmatmul.f32.gmra.mxu0 %v298
    %v317 = vpop.f32.mrf.mxu0
    %v318 = vadd.f32 0.0, %v317
    %319 = vdwg.mxu0
    %v321 = vsel %vm296, %v288, 0
    %323 = vmatpush.msra.mxu0 0.0
    %324 = vmatpush.msra.mxu0 0.0
    %325 = vmatpush.msra.mxu0 0.0
    %326 = vmatpush.msra.mxu0 0.0
    %327 = vmatpush.msra.mxu0 0.0
    %328 = vmatpush.msra.mxu0 0.0
    %329 = vmatpush.msra.mxu0 0.0
    %330 = vmatpush.msra.mxu0 0.0
    %331 = vmatpush.msra.mxu0 0.0
    %332 = vmatpush.msra.mxu0 0.0
    %333 = vmatpush.msra.mxu0 0.0
    %334 = vmatpush.msra.mxu0 0.0
    %335 = vmatpush.msra.mxu0 0.0
    %336 = vmatpush.msra.mxu0 0.0
    %337 = vmatpush.msra.mxu0 %v293
    %338 = vmatpush.msra.mxu0 %v292
    %339 = vmatmul.f32.gmra.mxu0 %v321
    %v340 = vpop.f32.mrf.mxu0
    %v341 = vadd.f32 0.0, %v340
    %342 = vdwg.mxu0
    %v344 = vsel %vm296, %v289, 0
    %346 = vmatpush.msra.mxu0 0.0
    %347 = vmatpush.msra.mxu0 0.0
    %348 = vmatpush.msra.mxu0 0.0
    %349 = vmatpush.msra.mxu0 0.0
    %350 = vmatpush.msra.mxu0 0.0
    %351 = vmatpush.msra.mxu0 0.0
    %352 = vmatpush.msra.mxu0 0.0
    %353 = vmatpush.msra.mxu0 0.0
    %354 = vmatpush.msra.mxu0 0.0
    %355 = vmatpush.msra.mxu0 0.0
    %356 = vmatpush.msra.mxu0 0.0
    %357 = vmatpush.msra.mxu0 0.0
    %358 = vmatpush.msra.mxu0 0.0
    %359 = vmatpush.msra.mxu0 0.0
    %360 = vmatpush.msra.mxu0 %v295
    %361 = vmatpush.msra.mxu0 %v294
    %362 = vmatmul.f32.gmra.mxu0 %v344
    %v363 = vpop.f32.mrf.mxu0
    %v364 = vadd.f32 0.0, %v363
    %365 = vdwg.mxu0
    %366 = vst [vmem:[#allocation9] sm:$0x1] %v318
    %367 = vst [vmem:[#allocation9 + $0x1] sm:$0x1] %v341
    %368 = vst [vmem:[#allocation9 + $0x2] sm:$0x1] %v364
    // Predicated region
    $region38: #{tpu_custom_call.1} parent=1 // pred_check
      _
    $region39: #{tpu_custom_call.1} parent=1 // pred_check_branch
      %370 = sbr.rel (0) target = $region41
    $region40: #{tpu_custom_call.1} parent=1 // pred_region
      %372 = vsyncadd [#allocation6], 0
      %s373 = sshll.u32 [#allocation9], 4
      %s374 = int_to_ptr.vmem [resolvable:$true] %s373
      %s375 = sshll.u32 %s7, 4
      %s376 = int_to_ptr.hbm [resolvable:$true] %s375
      %381 = dma.vmem_to_hbm [thread:$0]  %s374, 48, %s376, [#allocation6], 16, 16, 1
    $region41: #{tpu_custom_call.1} parent=1 // pred_fallthru
      _
    // Predicated region
    $region42: #{tpu_custom_call.1} parent=1 // pred_check
      _
    $region43: #{tpu_custom_call.1} parent=1 // pred_check_branch
      %383 = sbr.rel (0) target = $region45
    $region44: #{tpu_custom_call.1} parent=1 // pred_region
      %385 = dma.done [#allocation6], 48
    $region45: #{tpu_custom_call.1} parent=1 // pred_fallthru
      _
    %386 = vsyncpa [#allocation5], 1
    %387 = vsyncpa [#allocation8], 1
    %388 = vsyncpa [#allocation6], 1

</llo_original>
